<compile_context>
chip_gen: v5e
topology: v5e:2x2
jax: 0.10.0
libtpu: 0.0.40
codegen_flags: <defaults>
</compile_context>

<pallas_src>
import functools

import jax
import jax.numpy as jnp
from jax.experimental import pallas as pl
from jax.experimental.pallas import tpu as pltpu

LANE = 128


def _round_up(n, m=LANE):
    return ((n + m - 1) // m) * m


def _make_fused_postnet_kernel(kernel_size, seq_len, num_layers, pad):
    def kernel(x_ref, w_ref, shift_ref, o_ref, buf_ref):
        # x_ref:     (1, S, C_p)       f32   one batch item, channels-last
        # w_ref:     (L, K*C_p, C_p)   bf16  BN-scale-folded im2col weights
        # shift_ref: (L, 1, C_p)       f32   folded conv-bias + BN shift
        # o_ref:     (1, S, C_p)
        # buf_ref:   (S + K - 1, C_p)  f32   VMEM activation buffer ('same'-padded)
        #
        # Zero the buffer once: the K-1 halo rows stay zero for every layer
        # (only interior rows are ever rewritten), which is exactly Conv1d's
        # zero 'same' padding at every layer.
        buf_ref[...] = jnp.zeros_like(buf_ref)
        buf_ref[pad:pad + seq_len, :] = x_ref[0].astype(jnp.float32)

        for layer in range(num_layers):
            xp = buf_ref[...]                                # (S + K - 1, C_p) f32
            # im2col: K shifted slices concatenated along lanes -> one MXU matmul.
            slab = jnp.concatenate(
                [xp[t:t + seq_len, :] for t in range(kernel_size)], axis=1)
            y = jnp.dot(slab.astype(jnp.bfloat16), w_ref[layer],
                        preferred_element_type=jnp.float32)   # (S, C_p) f32 acc
            y = y + shift_ref[layer]                          # folded bias + BN
            if layer < num_layers - 1:
                buf_ref[pad:pad + seq_len, :] = jnp.tanh(y)   # EUP transcendental
            else:
                o_ref[0] = y.astype(o_ref.dtype)              # final layer: no tanh

    return kernel


def postnet_forward(x, w_all, shift_all, *, kernel_size):
    """Fused PostNet forward (inference): x (B, S, mel) -> (B, S, mel).

    The PyTorch permutes (B,S,C)->(B,C,S)->(B,S,C) are absorbed by operating
    channels-last directly.
    """
    b, s, mel_dim = x.shape
    num_layers, k_cin, c_p = w_all.shape
    pad = kernel_size // 2

    # Single tiny lane-padding copy of the input; everything else stays in VMEM.
    x_p = jnp.pad(x, ((0, 0), (0, 0), (0, c_p - mel_dim)))

    kernel = _make_fused_postnet_kernel(kernel_size, s, num_layers, pad)

    flops = 2 * b * s * num_layers * k_cin * c_p
    transcendentals = b * s * c_p * (num_layers - 1)
    bytes_accessed = (x_p.size * 4 + w_all.size * 2
                      + shift_all.size * 4 + b * s * c_p * 4)

    y = pl.pallas_call(
        kernel,
        out_shape=jax.ShapeDtypeStruct((b, s, c_p), x.dtype),
        grid_spec=pltpu.PrefetchScalarGridSpec(
            num_scalar_prefetch=0,
            grid=(b,),
            in_specs=[
                # per-batch activation tile (pipelined across the grid)
                pl.BlockSpec((1, s, c_p), lambda i: (i, 0, 0)),
                # stacked weights / shifts: constant index_map -> VMEM-resident
                pl.BlockSpec((num_layers, k_cin, c_p), lambda i: (0, 0, 0)),
                pl.BlockSpec((num_layers, 1, c_p), lambda i: (0, 0, 0)),
            ],
            out_specs=pl.BlockSpec((1, s, c_p), lambda i: (i, 0, 0)),
            scratch_shapes=[pltpu.VMEM((s + 2 * pad, c_p), jnp.float32)],
        ),
        compiler_params=pltpu.CompilerParams(
            # batch items are independent -> megacore sharding on v7x
            dimension_semantics=("parallel",),
        ),
        cost_estimate=pl.CostEstimate(
            flops=flops,
            transcendentals=transcendentals,
            bytes_accessed=bytes_accessed,
        ),
    )(x_p, w_all, shift_all)
    return y[..., :mel_dim]


def fold_postnet_params(raw_params, eps, c_p=LANE, compute_dtype=jnp.bfloat16):
    """Fold Conv1d bias + BatchNorm1d (running stats) and stack all layers.

    * BN scale is folded INTO the conv weight (per output channel).
    * conv bias + BN shift collapse into one per-channel f32 shift.
    * weight is laid out for im2col: (Cout,Cin,K) -> (K,Cin,Cout), zero-padded
      to (K, C_p, C_p), reshaped to (K*C_p, C_p), cast to bf16 (MXU-native).

    Returns (w_all (L, K*C_p, C_p) bf16, shift_all (L, 1, C_p) f32).
    """
    ws, shifts = [], []
    for raw in raw_params:
        conv_w = raw["conv_w"]                                # (Cout, Cin, K)
        cout, cin, k = conv_w.shape
        scale = raw["gamma"] / jnp.sqrt(raw["var"] + eps)     # (Cout,)
        shift = raw["beta"] + scale * (raw["conv_b"] - raw["mean"])
        w = conv_w * scale[:, None, None]                     # fold BN scale
        w = jnp.transpose(w, (2, 1, 0))                       # (K, Cin, Cout)
        w = jnp.pad(w, ((0, 0), (0, c_p - cin), (0, c_p - cout)))
        ws.append(w.reshape(k * c_p, c_p).astype(compute_dtype))
        shifts.append(
            jnp.pad(shift, (0, c_p - cout)).reshape(1, c_p).astype(jnp.float32))
    return jnp.stack(ws), jnp.stack(shifts)


def ref_postnet(x, raw_params, *, kernel_size, eps):
    """Pure-JAX reference matching PyTorch PostNet.eval() semantics."""
    pad = kernel_size // 2
    s = x.shape[1]
    n = len(raw_params)
    h = x
    for i, p in enumerate(raw_params):
        hp = jnp.pad(h, ((0, 0), (pad, pad), (0, 0)))
        acc = jnp.zeros((h.shape[0], s, p["conv_w"].shape[0]), jnp.float32)
        for t in range(kernel_size):
            acc = acc + jnp.einsum(
                "bsc,oc->bso", hp[:, t:t + s, :], p["conv_w"][:, :, t],
                precision=jax.lax.Precision.HIGHEST)
        h = acc + p["conv_b"]
        h = (h - p["mean"]) / jnp.sqrt(p["var"] + eps) * p["gamma"] + p["beta"]
        if i < n - 1:
            h = jnp.tanh(h)
    return h


if __name__ == "__main__":
    batch, seq, hidden_dim, mel_dim = 2, 8, 32, 80
    kernel_size, eps = 5, 1e-5

    key = jax.random.PRNGKey(0)
    k_x, k_p = jax.random.split(key)
    x = jax.random.normal(k_x, (batch, seq, mel_dim), dtype=jnp.float32)

    # conv_first: mel->hidden, 4x hidden->hidden, conv_final: hidden->mel
    dims = ([(mel_dim, hidden_dim)]
            + [(hidden_dim, hidden_dim)] * 4
            + [(hidden_dim, mel_dim)])

    raw_params = []
    for i, (cin, cout) in enumerate(dims):
        ks = jax.random.split(jax.random.fold_in(k_p, i), 6)
        raw_params.append({
            "conv_w": 0.1 * jax.random.normal(
                ks[0], (cout, cin, kernel_size), jnp.float32),
            "conv_b": 0.1 * jax.random.normal(ks[1], (cout,), jnp.float32),
            "gamma": 1.0 + 0.1 * jax.random.normal(ks[2], (cout,), jnp.float32),
            "beta": 0.1 * jax.random.normal(ks[3], (cout,), jnp.float32),
            "mean": 0.1 * jax.random.normal(ks[4], (cout,), jnp.float32),
            "var": 0.5 + jnp.abs(jax.random.normal(ks[5], (cout,), jnp.float32)),
        })

    c_p = _round_up(max(mel_dim, hidden_dim))
    w_all, shift_all = fold_postnet_params(raw_params, eps, c_p=c_p)

    forward = jax.jit(
        functools.partial(postnet_forward, kernel_size=kernel_size))
    y = jax.block_until_ready(forward(x, w_all, shift_all))

    y_ref = ref_postnet(x, raw_params, kernel_size=kernel_size, eps=eps)
    assert y.shape == (batch, seq, mel_dim)
    # Tolerance: the kernel feeds bf16 inputs to the MXU (f32 accumulation) per
    # the perf review, while the reference runs f32 at Precision.HIGHEST; the
    # expected end-to-end error across the 6-layer stack is ~1e-2, so 2e-2
    # keeps margin while still catching structural bugs.
    assert jnp.allclose(y, y_ref, atol=2e-2, rtol=2e-2), (
        "max abs err = %f" % float(jnp.max(jnp.abs(y - y_ref))))

    print("KERNEL_OK")
</pallas_src>

<mosaic_0001>
module attributes {stable_mosaic.version = 11 : i64} {
  func.func @kernel(%arg0: i32, %arg1: memref<1x8x128xf32, #tpu.memory_space<vmem>>, %arg2: memref<6x640x128xbf16, #tpu.memory_space<vmem>>, %arg3: memref<6x1x128xf32, #tpu.memory_space<vmem>>, %arg4: memref<1x8x128xf32, #tpu.memory_space<vmem>>, %arg5: memref<12x128xf32, #tpu.memory_space<vmem>>) attributes {dimension_semantics = [#tpu.dimension_semantics<parallel>], iteration_bounds = array<i64: 2>, scalar_prefetch = 0 : i64, scratch_operands = 1 : i64, tpu.core_type = #tpu.core_type<tc>, window_params = [{transform_indices = @transform_0, window_bounds = array<i64: 1, 8, 128>}, {pipeline_mode = #tpu.pipeline_mode<synchronous>, transform_indices = @transform_1, window_bounds = array<i64: 6, 640, 128>}, {pipeline_mode = #tpu.pipeline_mode<synchronous>, transform_indices = @transform_2, window_bounds = array<i64: 6, 1, 128>}, {transform_indices = @transform_3, window_bounds = array<i64: 1, 8, 128>}]} {
    %cst = arith.constant 0.000000e+00 : f32
    %0 = vector.broadcast %cst : f32 to vector<12x128xf32>
    %c0 = arith.constant 0 : index
    %c0_0 = arith.constant 0 : index
    %1 = vector.load %arg5[%c0, %c0_0] : memref<12x128xf32, #tpu.memory_space<vmem>>, vector<12x128xf32>
    tpu.vector_store %arg5[%c0, %c0_0], %0 {strides = array<i32>} : memref<12x128xf32, #tpu.memory_space<vmem>>, vector<12x128xf32>,
    %c0_1 = arith.constant 0 : index
    %c0_2 = arith.constant 0 : index
    %c0_3 = arith.constant 0 : index
    %2 = vector.load %arg1[%c0_1, %c0_2, %c0_3] : memref<1x8x128xf32, #tpu.memory_space<vmem>>, vector<1x8x128xf32>
    %3 = vector.shape_cast %2 : vector<1x8x128xf32> to vector<8x128xf32>
    %c2 = arith.constant 2 : index
    %c0_4 = arith.constant 0 : index
    %4 = vector.load %arg5[%c2, %c0_4] : memref<12x128xf32, #tpu.memory_space<vmem>>, vector<8x128xf32>
    tpu.vector_store %arg5[%c2, %c0_4], %3 {strides = array<i32>} : memref<12x128xf32, #tpu.memory_space<vmem>>, vector<8x128xf32>,
    %c0_5 = arith.constant 0 : index
    %c0_6 = arith.constant 0 : index
    %5 = vector.load %arg5[%c0_5, %c0_6] : memref<12x128xf32, #tpu.memory_space<vmem>>, vector<12x128xf32>
    %6 = vector.extract_strided_slice %5 {offsets = [0, 0], sizes = [8, 128], strides = [1, 1]} : vector<12x128xf32> to vector<8x128xf32>
    %7 = vector.extract_strided_slice %5 {offsets = [1, 0], sizes = [8, 128], strides = [1, 1]} : vector<12x128xf32> to vector<8x128xf32>
    %8 = vector.extract_strided_slice %5 {offsets = [2, 0], sizes = [8, 128], strides = [1, 1]} : vector<12x128xf32> to vector<8x128xf32>
    %9 = vector.extract_strided_slice %5 {offsets = [3, 0], sizes = [8, 128], strides = [1, 1]} : vector<12x128xf32> to vector<8x128xf32>
    %10 = vector.extract_strided_slice %5 {offsets = [4, 0], sizes = [8, 128], strides = [1, 1]} : vector<12x128xf32> to vector<8x128xf32>
    %11 = tpu.concatenate %6, %7, %8, %9, %10 in 1 : vector<8x128xf32>, vector<8x128xf32>, vector<8x128xf32>, vector<8x128xf32>, vector<8x128xf32> -> vector<8x640xf32>
    %12 = arith.truncf %11 : vector<8x640xf32> to vector<8x640xbf16>
    %c0_7 = arith.constant 0 : index
    %c0_8 = arith.constant 0 : index
    %c0_9 = arith.constant 0 : index
    %13 = vector.load %arg2[%c0_7, %c0_8, %c0_9] : memref<6x640x128xbf16, #tpu.memory_space<vmem>>, vector<1x640x128xbf16>
    %14 = vector.shape_cast %13 : vector<1x640x128xbf16> to vector<640x128xbf16>
    %cst_10 = arith.constant dense<0.000000e+00> : vector<8x128xf32>
    %15 = tpu.matmul %12, %14, %cst_10 {dimension_numbers = #tpu.dot_dimension_numbers<[1], [0], [0], [1], [0, 0, 1, 1], [], []>} : vector<8x640xbf16>, vector<640x128xbf16>, vector<8x128xf32> -> vector<8x128xf32>
    %c0_11 = arith.constant 0 : index
    %c0_12 = arith.constant 0 : index
    %c0_13 = arith.constant 0 : index
    %16 = vector.load %arg3[%c0_11, %c0_12, %c0_13] : memref<6x1x128xf32, #tpu.memory_space<vmem>>, vector<1x1x128xf32>
    %17 = vector.shape_cast %16 : vector<1x1x128xf32> to vector<1x128xf32>
    %18 = vector.broadcast %17 : vector<1x128xf32> to vector<8x128xf32>
    %19 = arith.addf %15, %18 : vector<8x128xf32>
    %20 = math.tanh %19 : vector<8x128xf32>
    %c2_14 = arith.constant 2 : index
    %c0_15 = arith.constant 0 : index
    %21 = vector.load %arg5[%c2_14, %c0_15] : memref<12x128xf32, #tpu.memory_space<vmem>>, vector<8x128xf32>
    tpu.vector_store %arg5[%c2_14, %c0_15], %20 {strides = array<i32>} : memref<12x128xf32, #tpu.memory_space<vmem>>, vector<8x128xf32>,
    %c0_16 = arith.constant 0 : index
    %c0_17 = arith.constant 0 : index
    %22 = vector.load %arg5[%c0_16, %c0_17] : memref<12x128xf32, #tpu.memory_space<vmem>>, vector<12x128xf32>
    %23 = vector.extract_strided_slice %22 {offsets = [0, 0], sizes = [8, 128], strides = [1, 1]} : vector<12x128xf32> to vector<8x128xf32>
    %24 = vector.extract_strided_slice %22 {offsets = [1, 0], sizes = [8, 128], strides = [1, 1]} : vector<12x128xf32> to vector<8x128xf32>
    %25 = vector.extract_strided_slice %22 {offsets = [2, 0], sizes = [8, 128], strides = [1, 1]} : vector<12x128xf32> to vector<8x128xf32>
    %26 = vector.extract_strided_slice %22 {offsets = [3, 0], sizes = [8, 128], strides = [1, 1]} : vector<12x128xf32> to vector<8x128xf32>
    %27 = vector.extract_strided_slice %22 {offsets = [4, 0], sizes = [8, 128], strides = [1, 1]} : vector<12x128xf32> to vector<8x128xf32>
    %28 = tpu.concatenate %23, %24, %25, %26, %27 in 1 : vector<8x128xf32>, vector<8x128xf32>, vector<8x128xf32>, vector<8x128xf32>, vector<8x128xf32> -> vector<8x640xf32>
    %29 = arith.truncf %28 : vector<8x640xf32> to vector<8x640xbf16>
    %c1 = arith.constant 1 : index
    %c0_18 = arith.constant 0 : index
    %c0_19 = arith.constant 0 : index
    %30 = vector.load %arg2[%c1, %c0_18, %c0_19] : memref<6x640x128xbf16, #tpu.memory_space<vmem>>, vector<1x640x128xbf16>
    %31 = vector.shape_cast %30 : vector<1x640x128xbf16> to vector<640x128xbf16>
    %cst_20 = arith.constant dense<0.000000e+00> : vector<8x128xf32>
    %32 = tpu.matmul %29, %31, %cst_20 {dimension_numbers = #tpu.dot_dimension_numbers<[1], [0], [0], [1], [0, 0, 1, 1], [], []>} : vector<8x640xbf16>, vector<640x128xbf16>, vector<8x128xf32> -> vector<8x128xf32>
    %c1_21 = arith.constant 1 : index
    %c0_22 = arith.constant 0 : index
    %c0_23 = arith.constant 0 : index
    %33 = vector.load %arg3[%c1_21, %c0_22, %c0_23] : memref<6x1x128xf32, #tpu.memory_space<vmem>>, vector<1x1x128xf32>
    %34 = vector.shape_cast %33 : vector<1x1x128xf32> to vector<1x128xf32>
    %35 = vector.broadcast %34 : vector<1x128xf32> to vector<8x128xf32>
    %36 = arith.addf %32, %35 : vector<8x128xf32>
    %37 = math.tanh %36 : vector<8x128xf32>
    %c2_24 = arith.constant 2 : index
    %c0_25 = arith.constant 0 : index
    %38 = vector.load %arg5[%c2_24, %c0_25] : memref<12x128xf32, #tpu.memory_space<vmem>>, vector<8x128xf32>
    tpu.vector_store %arg5[%c2_24, %c0_25], %37 {strides = array<i32>} : memref<12x128xf32, #tpu.memory_space<vmem>>, vector<8x128xf32>,
    %c0_26 = arith.constant 0 : index
    %c0_27 = arith.constant 0 : index
    %39 = vector.load %arg5[%c0_26, %c0_27] : memref<12x128xf32, #tpu.memory_space<vmem>>, vector<12x128xf32>
    %40 = vector.extract_strided_slice %39 {offsets = [0, 0], sizes = [8, 128], strides = [1, 1]} : vector<12x128xf32> to vector<8x128xf32>
    %41 = vector.extract_strided_slice %39 {offsets = [1, 0], sizes = [8, 128], strides = [1, 1]} : vector<12x128xf32> to vector<8x128xf32>
    %42 = vector.extract_strided_slice %39 {offsets = [2, 0], sizes = [8, 128], strides = [1, 1]} : vector<12x128xf32> to vector<8x128xf32>
    %43 = vector.extract_strided_slice %39 {offsets = [3, 0], sizes = [8, 128], strides = [1, 1]} : vector<12x128xf32> to vector<8x128xf32>
    %44 = vector.extract_strided_slice %39 {offsets = [4, 0], sizes = [8, 128], strides = [1, 1]} : vector<12x128xf32> to vector<8x128xf32>
    %45 = tpu.concatenate %40, %41, %42, %43, %44 in 1 : vector<8x128xf32>, vector<8x128xf32>, vector<8x128xf32>, vector<8x128xf32>, vector<8x128xf32> -> vector<8x640xf32>
    %46 = arith.truncf %45 : vector<8x640xf32> to vector<8x640xbf16>
    %c2_28 = arith.constant 2 : index
    %c0_29 = arith.constant 0 : index
    %c0_30 = arith.constant 0 : index
    %47 = vector.load %arg2[%c2_28, %c0_29, %c0_30] : memref<6x640x128xbf16, #tpu.memory_space<vmem>>, vector<1x640x128xbf16>
    %48 = vector.shape_cast %47 : vector<1x640x128xbf16> to vector<640x128xbf16>
    %cst_31 = arith.constant dense<0.000000e+00> : vector<8x128xf32>
    %49 = tpu.matmul %46, %48, %cst_31 {dimension_numbers = #tpu.dot_dimension_numbers<[1], [0], [0], [1], [0, 0, 1, 1], [], []>} : vector<8x640xbf16>, vector<640x128xbf16>, vector<8x128xf32> -> vector<8x128xf32>
    %c2_32 = arith.constant 2 : index
    %c0_33 = arith.constant 0 : index
    %c0_34 = arith.constant 0 : index
    %50 = vector.load %arg3[%c2_32, %c0_33, %c0_34] : memref<6x1x128xf32, #tpu.memory_space<vmem>>, vector<1x1x128xf32>
    %51 = vector.shape_cast %50 : vector<1x1x128xf32> to vector<1x128xf32>
    %52 = vector.broadcast %51 : vector<1x128xf32> to vector<8x128xf32>
    %53 = arith.addf %49, %52 : vector<8x128xf32>
    %54 = math.tanh %53 : vector<8x128xf32>
    %c2_35 = arith.constant 2 : index
    %c0_36 = arith.constant 0 : index
    %55 = vector.load %arg5[%c2_35, %c0_36] : memref<12x128xf32, #tpu.memory_space<vmem>>, vector<8x128xf32>
    tpu.vector_store %arg5[%c2_35, %c0_36], %54 {strides = array<i32>} : memref<12x128xf32, #tpu.memory_space<vmem>>, vector<8x128xf32>,
    %c0_37 = arith.constant 0 : index
    %c0_38 = arith.constant 0 : index
    %56 = vector.load %arg5[%c0_37, %c0_38] : memref<12x128xf32, #tpu.memory_space<vmem>>, vector<12x128xf32>
    %57 = vector.extract_strided_slice %56 {offsets = [0, 0], sizes = [8, 128], strides = [1, 1]} : vector<12x128xf32> to vector<8x128xf32>
    %58 = vector.extract_strided_slice %56 {offsets = [1, 0], sizes = [8, 128], strides = [1, 1]} : vector<12x128xf32> to vector<8x128xf32>
    %59 = vector.extract_strided_slice %56 {offsets = [2, 0], sizes = [8, 128], strides = [1, 1]} : vector<12x128xf32> to vector<8x128xf32>
    %60 = vector.extract_strided_slice %56 {offsets = [3, 0], sizes = [8, 128], strides = [1, 1]} : vector<12x128xf32> to vector<8x128xf32>
    %61 = vector.extract_strided_slice %56 {offsets = [4, 0], sizes = [8, 128], strides = [1, 1]} : vector<12x128xf32> to vector<8x128xf32>
    %62 = tpu.concatenate %57, %58, %59, %60, %61 in 1 : vector<8x128xf32>, vector<8x128xf32>, vector<8x128xf32>, vector<8x128xf32>, vector<8x128xf32> -> vector<8x640xf32>
    %63 = arith.truncf %62 : vector<8x640xf32> to vector<8x640xbf16>
    %c3 = arith.constant 3 : index
    %c0_39 = arith.constant 0 : index
    %c0_40 = arith.constant 0 : index
    %64 = vector.load %arg2[%c3, %c0_39, %c0_40] : memref<6x640x128xbf16, #tpu.memory_space<vmem>>, vector<1x640x128xbf16>
    %65 = vector.shape_cast %64 : vector<1x640x128xbf16> to vector<640x128xbf16>
    %cst_41 = arith.constant dense<0.000000e+00> : vector<8x128xf32>
    %66 = tpu.matmul %63, %65, %cst_41 {dimension_numbers = #tpu.dot_dimension_numbers<[1], [0], [0], [1], [0, 0, 1, 1], [], []>} : vector<8x640xbf16>, vector<640x128xbf16>, vector<8x128xf32> -> vector<8x128xf32>
    %c3_42 = arith.constant 3 : index
    %c0_43 = arith.constant 0 : index
    %c0_44 = arith.constant 0 : index
    %67 = vector.load %arg3[%c3_42, %c0_43, %c0_44] : memref<6x1x128xf32, #tpu.memory_space<vmem>>, vector<1x1x128xf32>
    %68 = vector.shape_cast %67 : vector<1x1x128xf32> to vector<1x128xf32>
    %69 = vector.broadcast %68 : vector<1x128xf32> to vector<8x128xf32>
    %70 = arith.addf %66, %69 : vector<8x128xf32>
    %71 = math.tanh %70 : vector<8x128xf32>
    %c2_45 = arith.constant 2 : index
    %c0_46 = arith.constant 0 : index
    %72 = vector.load %arg5[%c2_45, %c0_46] : memref<12x128xf32, #tpu.memory_space<vmem>>, vector<8x128xf32>
    tpu.vector_store %arg5[%c2_45, %c0_46], %71 {strides = array<i32>} : memref<12x128xf32, #tpu.memory_space<vmem>>, vector<8x128xf32>,
    %c0_47 = arith.constant 0 : index
    %c0_48 = arith.constant 0 : index
    %73 = vector.load %arg5[%c0_47, %c0_48] : memref<12x128xf32, #tpu.memory_space<vmem>>, vector<12x128xf32>
    %74 = vector.extract_strided_slice %73 {offsets = [0, 0], sizes = [8, 128], strides = [1, 1]} : vector<12x128xf32> to vector<8x128xf32>
    %75 = vector.extract_strided_slice %73 {offsets = [1, 0], sizes = [8, 128], strides = [1, 1]} : vector<12x128xf32> to vector<8x128xf32>
    %76 = vector.extract_strided_slice %73 {offsets = [2, 0], sizes = [8, 128], strides = [1, 1]} : vector<12x128xf32> to vector<8x128xf32>
    %77 = vector.extract_strided_slice %73 {offsets = [3, 0], sizes = [8, 128], strides = [1, 1]} : vector<12x128xf32> to vector<8x128xf32>
    %78 = vector.extract_strided_slice %73 {offsets = [4, 0], sizes = [8, 128], strides = [1, 1]} : vector<12x128xf32> to vector<8x128xf32>
    %79 = tpu.concatenate %74, %75, %76, %77, %78 in 1 : vector<8x128xf32>, vector<8x128xf32>, vector<8x128xf32>, vector<8x128xf32>, vector<8x128xf32> -> vector<8x640xf32>
    %80 = arith.truncf %79 : vector<8x640xf32> to vector<8x640xbf16>
    %c4 = arith.constant 4 : index
    %c0_49 = arith.constant 0 : index
    %c0_50 = arith.constant 0 : index
    %81 = vector.load %arg2[%c4, %c0_49, %c0_50] : memref<6x640x128xbf16, #tpu.memory_space<vmem>>, vector<1x640x128xbf16>
    %82 = vector.shape_cast %81 : vector<1x640x128xbf16> to vector<640x128xbf16>
    %cst_51 = arith.constant dense<0.000000e+00> : vector<8x128xf32>
    %83 = tpu.matmul %80, %82, %cst_51 {dimension_numbers = #tpu.dot_dimension_numbers<[1], [0], [0], [1], [0, 0, 1, 1], [], []>} : vector<8x640xbf16>, vector<640x128xbf16>, vector<8x128xf32> -> vector<8x128xf32>
    %c4_52 = arith.constant 4 : index
    %c0_53 = arith.constant 0 : index
    %c0_54 = arith.constant 0 : index
    %84 = vector.load %arg3[%c4_52, %c0_53, %c0_54] : memref<6x1x128xf32, #tpu.memory_space<vmem>>, vector<1x1x128xf32>
    %85 = vector.shape_cast %84 : vector<1x1x128xf32> to vector<1x128xf32>
    %86 = vector.broadcast %85 : vector<1x128xf32> to vector<8x128xf32>
    %87 = arith.addf %83, %86 : vector<8x128xf32>
    %88 = math.tanh %87 : vector<8x128xf32>
    %c2_55 = arith.constant 2 : index
    %c0_56 = arith.constant 0 : index
    %89 = vector.load %arg5[%c2_55, %c0_56] : memref<12x128xf32, #tpu.memory_space<vmem>>, vector<8x128xf32>
    tpu.vector_store %arg5[%c2_55, %c0_56], %88 {strides = array<i32>} : memref<12x128xf32, #tpu.memory_space<vmem>>, vector<8x128xf32>,
    %c0_57 = arith.constant 0 : index
    %c0_58 = arith.constant 0 : index
    %90 = vector.load %arg5[%c0_57, %c0_58] : memref<12x128xf32, #tpu.memory_space<vmem>>, vector<12x128xf32>
    %91 = vector.extract_strided_slice %90 {offsets = [0, 0], sizes = [8, 128], strides = [1, 1]} : vector<12x128xf32> to vector<8x128xf32>
    %92 = vector.extract_strided_slice %90 {offsets = [1, 0], sizes = [8, 128], strides = [1, 1]} : vector<12x128xf32> to vector<8x128xf32>
    %93 = vector.extract_strided_slice %90 {offsets = [2, 0], sizes = [8, 128], strides = [1, 1]} : vector<12x128xf32> to vector<8x128xf32>
    %94 = vector.extract_strided_slice %90 {offsets = [3, 0], sizes = [8, 128], strides = [1, 1]} : vector<12x128xf32> to vector<8x128xf32>
    %95 = vector.extract_strided_slice %90 {offsets = [4, 0], sizes = [8, 128], strides = [1, 1]} : vector<12x128xf32> to vector<8x128xf32>
    %96 = tpu.concatenate %91, %92, %93, %94, %95 in 1 : vector<8x128xf32>, vector<8x128xf32>, vector<8x128xf32>, vector<8x128xf32>, vector<8x128xf32> -> vector<8x640xf32>
    %97 = arith.truncf %96 : vector<8x640xf32> to vector<8x640xbf16>
    %c5 = arith.constant 5 : index
    %c0_59 = arith.constant 0 : index
    %c0_60 = arith.constant 0 : index
    %98 = vector.load %arg2[%c5, %c0_59, %c0_60] : memref<6x640x128xbf16, #tpu.memory_space<vmem>>, vector<1x640x128xbf16>
    %99 = vector.shape_cast %98 : vector<1x640x128xbf16> to vector<640x128xbf16>
    %cst_61 = arith.constant dense<0.000000e+00> : vector<8x128xf32>
    %100 = tpu.matmul %97, %99, %cst_61 {dimension_numbers = #tpu.dot_dimension_numbers<[1], [0], [0], [1], [0, 0, 1, 1], [], []>} : vector<8x640xbf16>, vector<640x128xbf16>, vector<8x128xf32> -> vector<8x128xf32>
    %c5_62 = arith.constant 5 : index
    %c0_63 = arith.constant 0 : index
    %c0_64 = arith.constant 0 : index
    %101 = vector.load %arg3[%c5_62, %c0_63, %c0_64] : memref<6x1x128xf32, #tpu.memory_space<vmem>>, vector<1x1x128xf32>
    %102 = vector.shape_cast %101 : vector<1x1x128xf32> to vector<1x128xf32>
    %103 = vector.broadcast %102 : vector<1x128xf32> to vector<8x128xf32>
    %104 = arith.addf %100, %103 : vector<8x128xf32>
    %c0_65 = arith.constant 0 : index
    %c0_66 = arith.constant 0 : index
    %c0_67 = arith.constant 0 : index
    %105 = vector.load %arg4[%c0_65, %c0_66, %c0_67] : memref<1x8x128xf32, #tpu.memory_space<vmem>>, vector<1x8x128xf32>
    %106 = vector.shape_cast %105 : vector<1x8x128xf32> to vector<8x128xf32>
    %107 = vector.shape_cast %104 : vector<8x128xf32> to vector<1x8x128xf32>
    tpu.vector_store %arg4[%c0_65, %c0_66, %c0_67], %107 {strides = array<i32>} : memref<1x8x128xf32, #tpu.memory_space<vmem>>, vector<1x8x128xf32>,
    return
  }
  func.func @transform_0(%arg0: i32) -> (i32, i32, i32) {
    %c0_i32 = arith.constant 0 : i32
    %c0_i32_0 = arith.constant 0 : i32
    %c0_i32_1 = arith.constant 0 : i32
    return %arg0, %c0_i32, %c0_i32_0 : i32, i32, i32
  }
  func.func @transform_1(%arg0: i32) -> (i32, i32, i32) {
    %c0_i32 = arith.constant 0 : i32
    %c0_i32_0 = arith.constant 0 : i32
    %c0_i32_1 = arith.constant 0 : i32
    %c0_i32_2 = arith.constant 0 : i32
    return %c0_i32, %c0_i32_0, %c0_i32_1 : i32, i32, i32
  }
  func.func @transform_2(%arg0: i32) -> (i32, i32, i32) {
    %c0_i32 = arith.constant 0 : i32
    %c0_i32_0 = arith.constant 0 : i32
    %c0_i32_1 = arith.constant 0 : i32
    %c0_i32_2 = arith.constant 0 : i32
    return %c0_i32, %c0_i32_0, %c0_i32_1 : i32, i32, i32
  }
  func.func @transform_3(%arg0: i32) -> (i32, i32, i32) {
    %c0_i32 = arith.constant 0 : i32
    %c0_i32_0 = arith.constant 0 : i32
    %c0_i32_1 = arith.constant 0 : i32
    return %arg0, %c0_i32, %c0_i32_0 : i32, i32, i32
  }
}

</mosaic_0001>

<llo_original>
// kernel: postnet_forward.1
$region0: #{postnet_forward.1}
  #allocation0 [shape = 'u32[]', space=smem, size = 0x4, offset = 0x4, fixed_abs, tag = 'smem constant byte address 0x4 - core index']
  #allocation1 [shape = 'u32[72,128]{1,0:T(1,128)}', space=vmem, size = 0x9000, scoped, tag = 'internal scratch']
  #allocation2 [shape = 'f32[12,128]{1,0:T(8,128)}', space=vmem, size = 0x2000, scoped, tag = 'scratch operand']
  %s0 = inlined_call_operand.vmem [shape: f32[2,8,128], index: 0, kind: input, shape index: {}]
  %s1 = inlined_call_operand.hbm [shape: bf16[6,640,128], index: 1, kind: input, shape index: {}]
  %s2 = inlined_call_operand.vmem [shape: f32[6,1,128], index: 2, kind: input, shape index: {}]
  %s3 = inlined_call_operand.hbm [shape: f32[2,8,128], index: 3, kind: output, shape index: {}]
  %s4 = sld [smem:[#allocation0]]
  $region49: #{postnet_forward.1} parent=0
    _
  %s6 = ssub.s32 1, %s4
  %s7 = scalar_select 0, %s6, %s4
  $region1: #{postnet_forward.1} parent=0
    #allocation3 [shape = 'u8[983040]{0}', space=vmem, size = 0xf0000, scoped, tag = 'input window, operand 1, single buffered']
    #allocation4 [shape = 's32[2]{0}', space=sflag, size = 0x8, scoped, tag = 'scoped memory for postnet_forward.1']
    #allocation5 [shape = 's32[2]{0}', space=sflag, size = 0x8, scoped, tag = 'scoped memory for postnet_forward.1']
    #allocation6 [shape = 'u8[8192]{0}', space=vmem, size = 0x2000, scoped, tag = 'output window, operand 0']
    %8 = vsyncpa [#allocation4], 0
    %9 = vsyncpa [#allocation5], 0
    %s10 = scalar_lea.sflag [#allocation5], 1
    %11 = vsyncpa %s10, 0
    loop: start=0, step=1, limit=4
    $region2: #{postnet_forward.1} parent=1 // loop_pre_header
      _
    $region3: #{postnet_forward.1} parent=1 // loop_header
      %s13 = sphi 0, %s17
      %p14 = scmp.ge.s32.totalorder %s13, 4
      %s23 = sphi 0, %s25
      %s26 = sphi 0, %s23
      %s27 = sphi 0, %s26
      %s43 = sphi 0, %s27
      %s47 = sphi 0, %s47
      %s49 = sphi 0, %s47
      %s50 = sphi 0, %s49
      %s64 = sphi 0, %s50
      %s68 = sphi 0, %s68
      %s70 = sphi 0, %s68
      %s71 = sphi 0, %s70
      %s85 = sphi 0, %s71
      %s91 = sphi 0, %s93
      %s94 = sphi 0, %s91
      %s95 = sphi 0, %s94
      %s111 = sphi 0, %s95
    $region4: #{postnet_forward.1} parent=1 // loop_header_branch
      %16 = sbr.rel (%p14) target = $region8
    $region5: #{postnet_forward.1} parent=1 // loop_body
      %s18 = ssub.s32 %s13, 1
      %s19 = ssub.s32 %s13, 2
      %s20 = sadd.s32 %s13, 1
      %s21 = ssub.s32 %s13, %s20
      %p22 = scmp.eq.s32.totalorder %s21, 0
      %s24 = sadd.s32 %s23, 1
      %s25 = scalar_select %p22, %s23, %s24
      %p28 = pneg %p22
      %p29 = scmp.eq.s32.totalorder %s13, 1
      %p30 = por %p28, %p29
      %p31 = scmp.ne.s32.totalorder %s23, %s26
      %p32 = scmp.eq.s32.totalorder %s13, 0
      %p33 = por %p31, %p32
      %p34 = scmp.ne.s32.totalorder %s23, %s26
      %p35 = scmp.eq.s32.totalorder %s18, 1
      %p36 = por %p34, %p35
      %p37 = scmp.ne.s32.totalorder %s26, %s27
      %p38 = scmp.eq.s32.totalorder %s18, 0
      %p39 = por %p37, %p38
      %p40 = scmp.ne.s32.totalorder %s26, %s27
      %p41 = scmp.eq.s32.totalorder %s19, 1
      %p42 = por %p40, %p41
      %p44 = scmp.ne.s32.totalorder %s27, %s43
      %p45 = scmp.eq.s32.totalorder %s19, 0
      %p46 = por %p44, %p45
      %s48 = sadd.s32 %s47, 1
      %p51 = scmp.eq.s32.totalorder %s13, 1
      %p52 = scmp.ne.s32.totalorder %s47, %s49
      %p53 = scmp.eq.s32.totalorder %s13, 0
      %p54 = por %p52, %p53
      %p55 = scmp.ne.s32.totalorder %s47, %s49
      %p56 = scmp.eq.s32.totalorder %s18, 1
      %p57 = por %p55, %p56
      %p58 = scmp.ne.s32.totalorder %s49, %s50
      %p59 = scmp.eq.s32.totalorder %s18, 0
      %p60 = por %p58, %p59
      %p61 = scmp.ne.s32.totalorder %s49, %s50
      %p62 = scmp.eq.s32.totalorder %s19, 1
      %p63 = por %p61, %p62
      %p65 = scmp.ne.s32.totalorder %s50, %s64
      %p66 = scmp.eq.s32.totalorder %s19, 0
      %p67 = por %p65, %p66
      %s69 = sadd.s32 %s68, 1
      %p72 = scmp.eq.s32.totalorder %s13, 1
      %p73 = scmp.ne.s32.totalorder %s68, %s70
      %p74 = scmp.eq.s32.totalorder %s13, 0
      %p75 = por %p73, %p74
      %p76 = scmp.ne.s32.totalorder %s68, %s70
      %p77 = scmp.eq.s32.totalorder %s18, 1
      %p78 = por %p76, %p77
      %p79 = scmp.ne.s32.totalorder %s70, %s71
      %p80 = scmp.eq.s32.totalorder %s18, 0
      %p81 = por %p79, %p80
      %p82 = scmp.ne.s32.totalorder %s70, %s71
      %p83 = scmp.eq.s32.totalorder %s19, 1
      %p84 = por %p82, %p83
      %p86 = scmp.ne.s32.totalorder %s71, %s85
      %p87 = scmp.eq.s32.totalorder %s19, 0
      %p88 = por %p86, %p87
      %s89 = ssub.s32 %s13, %s20
      %p90 = scmp.eq.s32.totalorder %s89, 0
      %s92 = sadd.s32 %s91, 1
      %s93 = scalar_select %p90, %s91, %s92
      %p96 = pneg %p90
      %p97 = scmp.eq.s32.totalorder %s13, 1
      %p98 = por %p96, %p97
      %p99 = scmp.ne.s32.totalorder %s91, %s94
      %p100 = scmp.eq.s32.totalorder %s13, 0
      %p101 = por %p99, %p100
      %p102 = scmp.ne.s32.totalorder %s91, %s94
      %p103 = scmp.eq.s32.totalorder %s18, 1
      %p104 = por %p102, %p103
      %p105 = scmp.ne.s32.totalorder %s94, %s95
      %p106 = scmp.eq.s32.totalorder %s18, 0
      %p107 = por %p105, %p106
      %p108 = scmp.ne.s32.totalorder %s94, %s95
      %p109 = scmp.eq.s32.totalorder %s19, 1
      %p110 = por %p108, %p109
      %p112 = scmp.ne.s32.totalorder %s95, %s111
      %p113 = scmp.eq.s32.totalorder %s19, 0
      %p114 = por %p112, %p113
      %p115 = scmp.le.s32.totalorder 1, %s13
      %p116 = scmp.lt.s32.totalorder %s13, 3
      %p117 = pnand %p115, %p116
      %p118 = pneg %p117
      // Predicated region
      $region9: #{postnet_forward.1} parent=5 // pred_check
        _
      $region10: #{postnet_forward.1} parent=5 // pred_check_branch
        %120 = sbr.rel (%p117) target = $region12
      $region11: #{postnet_forward.1} parent=5 // pred_region
        %s121 = ssub.s32 %s13, 1
        // Predicated region
        $region13: #{postnet_forward.1} parent=11 // pred_check
          %p122 = pneg %p60
        $region14: #{postnet_forward.1} parent=11 // pred_check_branch
          %124 = sbr.rel (%p122) target = $region16
        $region15: #{postnet_forward.1} parent=11 // pred_region
          %126 = vsyncadd [#allocation4], 0
          %s127 = sshll.u32 %s1, 4
          %s128 = int_to_ptr.hbm [resolvable:$true] %s127
          %s129 = sshll.u32 [#allocation3], 4
          %s130 = int_to_ptr.vmem [resolvable:$true] %s129
          %135 = dma.hbm_to_vmem [thread:$0]  %s128, 30720, %s130, [#allocation4], 64, 64, 4
        $region16: #{postnet_forward.1} parent=11 // pred_fallthru
          _
        // Predicated region
        $region17: #{postnet_forward.1} parent=11 // pred_check
          %p136 = pneg %p81
        $region18: #{postnet_forward.1} parent=11 // pred_check_branch
          %138 = sbr.rel (%p136) target = $region20
        $region19: #{postnet_forward.1} parent=11 // pred_region
          _
        $region20: #{postnet_forward.1} parent=11 // pred_fallthru
          _
      $region12: #{postnet_forward.1} parent=5 // pred_fallthru
        _
      %p139 = scmp.lt.s32.totalorder %s13, 2
      // Predicated region
      $region21: #{postnet_forward.1} parent=5 // pred_check
        %p140 = pneg %p139
      $region22: #{postnet_forward.1} parent=5 // pred_check_branch
        %142 = sbr.rel (%p140) target = $region24
      $region23: #{postnet_forward.1} parent=5 // pred_region
        // Predicated region
        $region25: #{postnet_forward.1} parent=23 // pred_check
          %p143 = pneg %p33
        $region26: #{postnet_forward.1} parent=23 // pred_check_branch
          %145 = sbr.rel (%p143) target = $region28
        $region27: #{postnet_forward.1} parent=23 // pred_region
          %p146 = scmp.lt.s32.totalorder %s13, 1
          %s147 = scalar_select %p146, %s13, 1
          %s148 = smul.addr %s147, 8
          %s149 = scalar_lea.vmem %s0, %s148
        $region28: #{postnet_forward.1} parent=23 // pred_fallthru
          _
      $region24: #{postnet_forward.1} parent=5 // pred_fallthru
        _
      %p150 = scmp.le.s32.totalorder 1, %s13
      %p151 = scmp.lt.s32.totalorder %s13, 3
      %p152 = pnand %p150, %p151
      %p153 = pneg %p152
      // Predicated region
      $region29: #{postnet_forward.1} parent=5 // pred_check
        _
      $region30: #{postnet_forward.1} parent=5 // pred_check_branch
        %155 = sbr.rel (%p152) target = $region32
      $region31: #{postnet_forward.1} parent=5 // pred_region
        %s156 = ssub.s32 %s13, 1
        // Predicated region
        $region33: #{postnet_forward.1} parent=31 // pred_check
          %p157 = pneg %p60
        $region34: #{postnet_forward.1} parent=31 // pred_check_branch
          %159 = sbr.rel (%p157) target = $region36
        $region35: #{postnet_forward.1} parent=31 // pred_region
          %161 = dma.done [#allocation4], 30720
        $region36: #{postnet_forward.1} parent=31 // pred_fallthru
          _
        %p162 = scmp.lt.s32.totalorder %s18, 1
        %s163 = scalar_select %p162, %s18, 1
        %s164 = smul.addr %s163, 8
        %s165 = scalar_lea.vmem %s0, %s164
        %p166 = pneg %p39
        %p167 = pneg %p36
        %p168 = pneg %p60
        %p169 = pneg %p57
        %p170 = pneg %p81
        %p171 = pneg %p78
        %p172 = pneg %p107
        %p173 = pneg %p104
        %s174 = sand.u32 %s94, 1
        %s175 = scalar_lea.sflag [#allocation5], %s174
        %s176 = sand.u32 %s94, 1
        %s177 = smul.addr %s176, 8
        %s178 = scalar_lea.vmem [#allocation6], %s177
        %p179 = scmp.lt.s32.totalorder %s18, 1
        %s180 = scalar_select %p179, %s18, 1
        %s181 = smul.addr %s180, 8
        %s182 = scalar_lea.vmem %s0, %s181
        %183 = vst [vmem:[#allocation2] sm:$0xff] 0.0
        %184 = vst [vmem:[#allocation2 + $0x8] sm:$0xf] 0.0
        %v185 = vld [vmem:[%s182] sm:$0xff]
        %186 = vst [vmem:[#allocation2 + $0x2] sm:$0xff] %v185
        %v187 = vld [vmem:[#allocation2] sm:$0xff]
        %v188 = vld [vmem:[#allocation2 + $0x8] sm:$0xf]
        %vm191 = vcmask 1046528
        %v192 = vrot.slane %v187, 1
        %v193 = vrot.slane %v188, 1
        %v194 = vsel %vm191, %v192, %v193
        %vm196 = vcmask 1045504
        %v197 = vrot.slane %v187, 2
        %v198 = vrot.slane %v188, 2
        %v199 = vsel %vm196, %v197, %v198
        %vm201 = vcmask 1044480
        %v202 = vrot.slane %v187, 3
        %v203 = vrot.slane %v188, 3
        %v204 = vsel %vm201, %v202, %v203
        %vm206 = vcmask 1043456
        %v207 = vrot.slane %v187, 4
        %v208 = vrot.slane %v188, 4
        %v209 = vsel %vm206, %v207, %v208
        %v211 = vpack.c.bf16 %v187, %v187
        %v212 = vpack.c.bf16 %v194, %v194
        %v213 = vpack.c.bf16 %v199, %v199
        %v214 = vpack.c.bf16 %v204, %v204
        %v215 = vpack.c.bf16 %v209, %v209
        %v216 = vld [vmem:[#allocation3] sm:$0xf]
        %v217 = vld [vmem:[#allocation3 + $0x4] sm:$0xf]
        %v218 = vld [vmem:[#allocation3 + $0x8] sm:$0xf]
        %v219 = vld [vmem:[#allocation3 + $0xc] sm:$0xf]
        %v220 = vld [vmem:[#allocation3 + $0x10] sm:$0xf]
        %v221 = vld [vmem:[#allocation3 + $0x14] sm:$0xf]
        %v222 = vld [vmem:[#allocation3 + $0x18] sm:$0xf]
        %v223 = vld [vmem:[#allocation3 + $0x1c] sm:$0xf]
        %v224 = vld [vmem:[#allocation3 + $0x20] sm:$0xf]
        %v225 = vld [vmem:[#allocation3 + $0x24] sm:$0xf]
        %v226 = vld [vmem:[#allocation3 + $0x28] sm:$0xf]
        %v227 = vld [vmem:[#allocation3 + $0x2c] sm:$0xf]
        %v228 = vld [vmem:[#allocation3 + $0x30] sm:$0xf]
        %v229 = vld [vmem:[#allocation3 + $0x34] sm:$0xf]
        %v230 = vld [vmem:[#allocation3 + $0x38] sm:$0xf]
        %v231 = vld [vmem:[#allocation3 + $0x3c] sm:$0xf]
        %v232 = vld [vmem:[#allocation3 + $0x40] sm:$0xf]
        %v233 = vld [vmem:[#allocation3 + $0x44] sm:$0xf]
        %v234 = vld [vmem:[#allocation3 + $0x48] sm:$0xf]
        %v235 = vld [vmem:[#allocation3 + $0x4c] sm:$0xf]
        %v236 = vld [vmem:[#allocation3 + $0x50] sm:$0xf]
        %v237 = vld [vmem:[#allocation3 + $0x54] sm:$0xf]
        %v238 = vld [vmem:[#allocation3 + $0x58] sm:$0xf]
        %v239 = vld [vmem:[#allocation3 + $0x5c] sm:$0xf]
        %v240 = vld [vmem:[#allocation3 + $0x60] sm:$0xf]
        %v241 = vld [vmem:[#allocation3 + $0x64] sm:$0xf]
        %v242 = vld [vmem:[#allocation3 + $0x68] sm:$0xf]
        %v243 = vld [vmem:[#allocation3 + $0x6c] sm:$0xf]
        %v244 = vld [vmem:[#allocation3 + $0x70] sm:$0xf]
        %v245 = vld [vmem:[#allocation3 + $0x74] sm:$0xf]
        %v246 = vld [vmem:[#allocation3 + $0x78] sm:$0xf]
        %v247 = vld [vmem:[#allocation3 + $0x7c] sm:$0xf]
        %v248 = vld [vmem:[#allocation3 + $0x80] sm:$0xf]
        %v249 = vld [vmem:[#allocation3 + $0x84] sm:$0xf]
        %v250 = vld [vmem:[#allocation3 + $0x88] sm:$0xf]
        %v251 = vld [vmem:[#allocation3 + $0x8c] sm:$0xf]
        %v252 = vld [vmem:[#allocation3 + $0x90] sm:$0xf]
        %v253 = vld [vmem:[#allocation3 + $0x94] sm:$0xf]
        %v254 = vld [vmem:[#allocation3 + $0x98] sm:$0xf]
        %v255 = vld [vmem:[#allocation3 + $0x9c] sm:$0xf]
        %v256 = vld [vmem:[#allocation3 + $0xa0] sm:$0xf]
        %v257 = vld [vmem:[#allocation3 + $0xa4] sm:$0xf]
        %v258 = vld [vmem:[#allocation3 + $0xa8] sm:$0xf]
        %v259 = vld [vmem:[#allocation3 + $0xac] sm:$0xf]
        %v260 = vld [vmem:[#allocation3 + $0xb0] sm:$0xf]
        %v261 = vld [vmem:[#allocation3 + $0xb4] sm:$0xf]
        %v262 = vld [vmem:[#allocation3 + $0xb8] sm:$0xf]
        %v263 = vld [vmem:[#allocation3 + $0xbc] sm:$0xf]
        %v264 = vld [vmem:[#allocation3 + $0xc0] sm:$0xf]
        %v265 = vld [vmem:[#allocation3 + $0xc4] sm:$0xf]
        %v266 = vld [vmem:[#allocation3 + $0xc8] sm:$0xf]
        %v267 = vld [vmem:[#allocation3 + $0xcc] sm:$0xf]
        %v268 = vld [vmem:[#allocation3 + $0xd0] sm:$0xf]
        %v269 = vld [vmem:[#allocation3 + $0xd4] sm:$0xf]
        %v270 = vld [vmem:[#allocation3 + $0xd8] sm:$0xf]
        %v271 = vld [vmem:[#allocation3 + $0xdc] sm:$0xf]
        %v272 = vld [vmem:[#allocation3 + $0xe0] sm:$0xf]
        %v273 = vld [vmem:[#allocation3 + $0xe4] sm:$0xf]
        %v274 = vld [vmem:[#allocation3 + $0xe8] sm:$0xf]
        %v275 = vld [vmem:[#allocation3 + $0xec] sm:$0xf]
        %v276 = vld [vmem:[#allocation3 + $0xf0] sm:$0xf]
        %v277 = vld [vmem:[#allocation3 + $0xf4] sm:$0xf]
        %v278 = vld [vmem:[#allocation3 + $0xf8] sm:$0xf]
        %v279 = vld [vmem:[#allocation3 + $0xfc] sm:$0xf]
        %v280 = vld [vmem:[#allocation3 + $0x100] sm:$0xf]
        %v281 = vld [vmem:[#allocation3 + $0x104] sm:$0xf]
        %v282 = vld [vmem:[#allocation3 + $0x108] sm:$0xf]
        %v283 = vld [vmem:[#allocation3 + $0x10c] sm:$0xf]
        %v284 = vld [vmem:[#allocation3 + $0x110] sm:$0xf]
        %v285 = vld [vmem:[#allocation3 + $0x114] sm:$0xf]
        %v286 = vld [vmem:[#allocation3 + $0x118] sm:$0xf]
        %v287 = vld [vmem:[#allocation3 + $0x11c] sm:$0xf]
        %v288 = vld [vmem:[#allocation3 + $0x120] sm:$0xf]
        %v289 = vld [vmem:[#allocation3 + $0x124] sm:$0xf]
        %v290 = vld [vmem:[#allocation3 + $0x128] sm:$0xf]
        %v291 = vld [vmem:[#allocation3 + $0x12c] sm:$0xf]
        %v292 = vld [vmem:[#allocation3 + $0x130] sm:$0xf]
        %v293 = vld [vmem:[#allocation3 + $0x134] sm:$0xf]
        %v294 = vld [vmem:[#allocation3 + $0x138] sm:$0xf]
        %v295 = vld [vmem:[#allocation3 + $0x13c] sm:$0xf]
        %v296 = vld [vmem:[%s2] sm:$0x1]
        %v298 = vperm.slane %v296, 0
        %v380 = vunpack.c.l.b16 %v216
        %v381 = vunpack.c.l.b16 %v217
        %v382 = vunpack.c.l.b16 %v218
        %v383 = vunpack.c.l.b16 %v219
        %v384 = vunpack.c.l.b16 %v220
        %v385 = vunpack.c.l.b16 %v221
        %v386 = vunpack.c.l.b16 %v222
        %v387 = vunpack.c.l.b16 %v223
        %v388 = vunpack.c.l.b16 %v224
        %v389 = vunpack.c.l.b16 %v225
        %v390 = vunpack.c.l.b16 %v226
        %v391 = vunpack.c.l.b16 %v227
        %v392 = vunpack.c.l.b16 %v228
        %v393 = vunpack.c.l.b16 %v229
        %v394 = vunpack.c.l.b16 %v230
        %v395 = vunpack.c.l.b16 %v231
        %v396 = vunpack.c.l.b16 %v232
        %v397 = vunpack.c.l.b16 %v233
        %v398 = vunpack.c.l.b16 %v234
        %v399 = vunpack.c.l.b16 %v235
        %v400 = vunpack.c.l.b16 %v236
        %v401 = vunpack.c.l.b16 %v237
        %v402 = vunpack.c.l.b16 %v238
        %v403 = vunpack.c.l.b16 %v239
        %v404 = vunpack.c.l.b16 %v240
        %v405 = vunpack.c.l.b16 %v241
        %v406 = vunpack.c.l.b16 %v242
        %v407 = vunpack.c.l.b16 %v243
        %v408 = vunpack.c.l.b16 %v244
        %v409 = vunpack.c.l.b16 %v245
        %v410 = vunpack.c.l.b16 %v246
        %v411 = vunpack.c.l.b16 %v247
        %v412 = vunpack.c.l.b16 %v248
        %v413 = vunpack.c.l.b16 %v249
        %v414 = vunpack.c.l.b16 %v250
        %v415 = vunpack.c.l.b16 %v251
        %v416 = vunpack.c.l.b16 %v252
        %v417 = vunpack.c.l.b16 %v253
        %v418 = vunpack.c.l.b16 %v254
        %v419 = vunpack.c.l.b16 %v255
        %v420 = vunpack.c.l.b16 %v256
        %v421 = vunpack.c.l.b16 %v257
        %v422 = vunpack.c.l.b16 %v258
        %v423 = vunpack.c.l.b16 %v259
        %v424 = vunpack.c.l.b16 %v260
        %v425 = vunpack.c.l.b16 %v261
        %v426 = vunpack.c.l.b16 %v262
        %v427 = vunpack.c.l.b16 %v263
        %v428 = vunpack.c.l.b16 %v264
        %v429 = vunpack.c.l.b16 %v265
        %v430 = vunpack.c.l.b16 %v266
        %v431 = vunpack.c.l.b16 %v267
        %v432 = vunpack.c.l.b16 %v268
        %v433 = vunpack.c.l.b16 %v269
        %v434 = vunpack.c.l.b16 %v270
        %v435 = vunpack.c.l.b16 %v271
        %v436 = vunpack.c.l.b16 %v272
        %v437 = vunpack.c.l.b16 %v273
        %v438 = vunpack.c.l.b16 %v274
        %v439 = vunpack.c.l.b16 %v275
        %v440 = vunpack.c.l.b16 %v276
        %v441 = vunpack.c.l.b16 %v277
        %v442 = vunpack.c.l.b16 %v278
        %v443 = vunpack.c.l.b16 %v279
        %v444 = vunpack.c.l.b16 %v280
        %v445 = vunpack.c.l.b16 %v281
        %v446 = vunpack.c.l.b16 %v282
        %v447 = vunpack.c.l.b16 %v283
        %v448 = vunpack.c.l.b16 %v284
        %v449 = vunpack.c.l.b16 %v285
        %v450 = vunpack.c.l.b16 %v286
        %v451 = vunpack.c.l.b16 %v287
        %v452 = vunpack.c.l.b16 %v288
        %v453 = vunpack.c.l.b16 %v289
        %v454 = vunpack.c.l.b16 %v290
        %v455 = vunpack.c.l.b16 %v291
        %v456 = vunpack.c.l.b16 %v292
        %v457 = vunpack.c.l.b16 %v293
        %v458 = vunpack.c.l.b16 %v294
        %v459 = vunpack.c.l.b16 %v295
        %v460 = vpack.c.b16 %v381, %v380
        %v461 = vpack.c.b16 %v383, %v382
        %v462 = vpack.c.b16 %v385, %v384
        %v463 = vpack.c.b16 %v387, %v386
        %v464 = vpack.c.b16 %v389, %v388
        %v465 = vpack.c.b16 %v391, %v390
        %v466 = vpack.c.b16 %v393, %v392
        %v467 = vpack.c.b16 %v395, %v394
        %v468 = vpack.c.b16 %v397, %v396
        %v469 = vpack.c.b16 %v399, %v398
        %v470 = vpack.c.b16 %v401, %v400
        %v471 = vpack.c.b16 %v403, %v402
        %v472 = vpack.c.b16 %v405, %v404
        %v473 = vpack.c.b16 %v407, %v406
        %v474 = vpack.c.b16 %v409, %v408
        %v475 = vpack.c.b16 %v411, %v410
        %v476 = vpack.c.b16 %v413, %v412
        %v477 = vpack.c.b16 %v415, %v414
        %v478 = vpack.c.b16 %v417, %v416
        %v479 = vpack.c.b16 %v419, %v418
        %v480 = vpack.c.b16 %v421, %v420
        %v481 = vpack.c.b16 %v423, %v422
        %v482 = vpack.c.b16 %v425, %v424
        %v483 = vpack.c.b16 %v427, %v426
        %v484 = vpack.c.b16 %v429, %v428
        %v485 = vpack.c.b16 %v431, %v430
        %v486 = vpack.c.b16 %v433, %v432
        %v487 = vpack.c.b16 %v435, %v434
        %v488 = vpack.c.b16 %v437, %v436
        %v489 = vpack.c.b16 %v439, %v438
        %v490 = vpack.c.b16 %v441, %v440
        %v491 = vpack.c.b16 %v443, %v442
        %v492 = vpack.c.b16 %v445, %v444
        %v493 = vpack.c.b16 %v447, %v446
        %v494 = vpack.c.b16 %v449, %v448
        %v495 = vpack.c.b16 %v451, %v450
        %v496 = vpack.c.b16 %v453, %v452
        %v497 = vpack.c.b16 %v455, %v454
        %v498 = vpack.c.b16 %v457, %v456
        %v499 = vpack.c.b16 %v459, %v458
        %540 = vmatpush.bf16.msra.mxu0 %v467
        %541 = vmatpush.bf16.msra.mxu0 %v466
        %542 = vmatpush.bf16.msra.mxu0 %v465
        %543 = vmatpush.bf16.msra.mxu0 %v464
        %544 = vmatpush.bf16.msra.mxu0 %v463
        %545 = vmatpush.bf16.msra.mxu0 %v462
        %546 = vmatpush.bf16.msra.mxu0 %v461
        %547 = vmatpush.bf16.msra.mxu0 %v460
        %548 = vmatmul.bf16.gmra.mxu0 %v211
        %v549 = vpop.f32.mrf.mxu0
        %v550 = vadd.f32 %v298, %v549
        %v551 = vpop.f32.mrf.mxu0
        %552 = vdwg.mxu0
        %553 = vmatpush.bf16.msra.mxu0 %v475
        %554 = vmatpush.bf16.msra.mxu0 %v474
        %555 = vmatpush.bf16.msra.mxu0 %v473
        %556 = vmatpush.bf16.msra.mxu0 %v472
        %557 = vmatpush.bf16.msra.mxu0 %v471
        %558 = vmatpush.bf16.msra.mxu0 %v470
        %559 = vmatpush.bf16.msra.mxu0 %v469
        %560 = vmatpush.bf16.msra.mxu0 %v468
        %561 = vmatmul.bf16.gmra.mxu0 %v212
        %v562 = vpop.f32.mrf.mxu0
        %v563 = vadd.f32 %v550, %v562
        %v564 = vpop.f32.mrf.mxu0
        %565 = vdwg.mxu0
        %566 = vmatpush.bf16.msra.mxu0 %v483
        %567 = vmatpush.bf16.msra.mxu0 %v482
        %568 = vmatpush.bf16.msra.mxu0 %v481
        %569 = vmatpush.bf16.msra.mxu0 %v480
        %570 = vmatpush.bf16.msra.mxu0 %v479
        %571 = vmatpush.bf16.msra.mxu0 %v478
        %572 = vmatpush.bf16.msra.mxu0 %v477
        %573 = vmatpush.bf16.msra.mxu0 %v476
        %574 = vmatmul.bf16.gmra.mxu0 %v213
        %v575 = vpop.f32.mrf.mxu0
        %v576 = vadd.f32 %v563, %v575
        %v577 = vpop.f32.mrf.mxu0
        %578 = vdwg.mxu0
        %579 = vmatpush.bf16.msra.mxu0 %v491
        %580 = vmatpush.bf16.msra.mxu0 %v490
        %581 = vmatpush.bf16.msra.mxu0 %v489
        %582 = vmatpush.bf16.msra.mxu0 %v488
        %583 = vmatpush.bf16.msra.mxu0 %v487
        %584 = vmatpush.bf16.msra.mxu0 %v486
        %585 = vmatpush.bf16.msra.mxu0 %v485
        %586 = vmatpush.bf16.msra.mxu0 %v484
        %587 = vmatmul.bf16.gmra.mxu0 %v214
        %v588 = vpop.f32.mrf.mxu0
        %v589 = vadd.f32 %v576, %v588
        %v590 = vpop.f32.mrf.mxu0
        %591 = vdwg.mxu0
        %592 = vmatpush.bf16.msra.mxu0 %v499
        %593 = vmatpush.bf16.msra.mxu0 %v498
        %594 = vmatpush.bf16.msra.mxu0 %v497
        %595 = vmatpush.bf16.msra.mxu0 %v496
        %596 = vmatpush.bf16.msra.mxu0 %v495
        %597 = vmatpush.bf16.msra.mxu0 %v494
        %598 = vmatpush.bf16.msra.mxu0 %v493
        %599 = vmatpush.bf16.msra.mxu0 %v492
        %600 = vmatmul.bf16.gmra.mxu0 %v215
        %v601 = vpop.f32.mrf.mxu0
        %v602 = vadd.f32 %v589, %v601
        %v603 = vpop.f32.mrf.mxu0
        %604 = vdwg.mxu0
        %v605 = vtanh.pop %v602
        %606 = vst [vmem:[#allocation2 + $0x2] sm:$0xff] %v605
        %v607 = vld [vmem:[#allocation2] sm:$0xff]
        %v608 = vld [vmem:[#allocation2 + $0x8] sm:$0xf]
        %v611 = vrot.slane %v607, 1
        %v612 = vrot.slane %v608, 1
        %v613 = vsel %vm191, %v611, %v612
        %v615 = vrot.slane %v607, 2
        %v616 = vrot.slane %v608, 2
        %v617 = vsel %vm196, %v615, %v616
        %v619 = vrot.slane %v607, 3
        %v620 = vrot.slane %v608, 3
        %v621 = vsel %vm201, %v619, %v620
        %v623 = vrot.slane %v607, 4
        %v624 = vrot.slane %v608, 4
        %v625 = vsel %vm206, %v623, %v624
        %v627 = vpack.c.bf16 %v607, %v607
        %v628 = vpack.c.bf16 %v613, %v613
        %v629 = vpack.c.bf16 %v617, %v617
        %v630 = vpack.c.bf16 %v621, %v621
        %v631 = vpack.c.bf16 %v625, %v625
        %s632 = scalar_lea.vmem [#allocation3], 320
        %v633 = vld [vmem:[%s632] sm:$0xf]
        %v634 = vld [vmem:[%s632 + $0x4] sm:$0xf]
        %v635 = vld [vmem:[%s632 + $0x8] sm:$0xf]
        %v636 = vld [vmem:[%s632 + $0xc] sm:$0xf]
        %v637 = vld [vmem:[%s632 + $0x10] sm:$0xf]
        %v638 = vld [vmem:[%s632 + $0x14] sm:$0xf]
        %v639 = vld [vmem:[%s632 + $0x18] sm:$0xf]
        %v640 = vld [vmem:[%s632 + $0x1c] sm:$0xf]
        %v641 = vld [vmem:[%s632 + $0x20] sm:$0xf]
        %v642 = vld [vmem:[%s632 + $0x24] sm:$0xf]
        %v643 = vld [vmem:[%s632 + $0x28] sm:$0xf]
        %v644 = vld [vmem:[%s632 + $0x2c] sm:$0xf]
        %v645 = vld [vmem:[%s632 + $0x30] sm:$0xf]
        %v646 = vld [vmem:[%s632 + $0x34] sm:$0xf]
        %v647 = vld [vmem:[%s632 + $0x38] sm:$0xf]
        %v648 = vld [vmem:[%s632 + $0x3c] sm:$0xf]
        %v649 = vld [vmem:[%s632 + $0x40] sm:$0xf]
        %v650 = vld [vmem:[%s632 + $0x44] sm:$0xf]
        %v651 = vld [vmem:[%s632 + $0x48] sm:$0xf]
        %v652 = vld [vmem:[%s632 + $0x4c] sm:$0xf]
        %v653 = vld [vmem:[%s632 + $0x50] sm:$0xf]
        %v654 = vld [vmem:[%s632 + $0x54] sm:$0xf]
        %v655 = vld [vmem:[%s632 + $0x58] sm:$0xf]
        %v656 = vld [vmem:[%s632 + $0x5c] sm:$0xf]
        %v657 = vld [vmem:[%s632 + $0x60] sm:$0xf]
        %v658 = vld [vmem:[%s632 + $0x64] sm:$0xf]
        %v659 = vld [vmem:[%s632 + $0x68] sm:$0xf]
        %v660 = vld [vmem:[%s632 + $0x6c] sm:$0xf]
        %v661 = vld [vmem:[%s632 + $0x70] sm:$0xf]
        %v662 = vld [vmem:[%s632 + $0x74] sm:$0xf]
        %v663 = vld [vmem:[%s632 + $0x78] sm:$0xf]
        %v664 = vld [vmem:[%s632 + $0x7c] sm:$0xf]
        %v665 = vld [vmem:[%s632 + $0x80] sm:$0xf]
        %v666 = vld [vmem:[%s632 + $0x84] sm:$0xf]
        %v667 = vld [vmem:[%s632 + $0x88] sm:$0xf]
        %v668 = vld [vmem:[%s632 + $0x8c] sm:$0xf]
        %v669 = vld [vmem:[%s632 + $0x90] sm:$0xf]
        %v670 = vld [vmem:[%s632 + $0x94] sm:$0xf]
        %v671 = vld [vmem:[%s632 + $0x98] sm:$0xf]
        %v672 = vld [vmem:[%s632 + $0x9c] sm:$0xf]
        %v673 = vld [vmem:[%s632 + $0xa0] sm:$0xf]
        %v674 = vld [vmem:[%s632 + $0xa4] sm:$0xf]
        %v675 = vld [vmem:[%s632 + $0xa8] sm:$0xf]
        %v676 = vld [vmem:[%s632 + $0xac] sm:$0xf]
        %v677 = vld [vmem:[%s632 + $0xb0] sm:$0xf]
        %v678 = vld [vmem:[%s632 + $0xb4] sm:$0xf]
        %v679 = vld [vmem:[%s632 + $0xb8] sm:$0xf]
        %v680 = vld [vmem:[%s632 + $0xbc] sm:$0xf]
        %v681 = vld [vmem:[%s632 + $0xc0] sm:$0xf]
        %v682 = vld [vmem:[%s632 + $0xc4] sm:$0xf]
        %v683 = vld [vmem:[%s632 + $0xc8] sm:$0xf]
        %v684 = vld [vmem:[%s632 + $0xcc] sm:$0xf]
        %v685 = vld [vmem:[%s632 + $0xd0] sm:$0xf]
        %v686 = vld [vmem:[%s632 + $0xd4] sm:$0xf]
        %v687 = vld [vmem:[%s632 + $0xd8] sm:$0xf]
        %v688 = vld [vmem:[%s632 + $0xdc] sm:$0xf]
        %v689 = vld [vmem:[%s632 + $0xe0] sm:$0xf]
        %v690 = vld [vmem:[%s632 + $0xe4] sm:$0xf]
        %v691 = vld [vmem:[%s632 + $0xe8] sm:$0xf]
        %v692 = vld [vmem:[%s632 + $0xec] sm:$0xf]
        %v693 = vld [vmem:[%s632 + $0xf0] sm:$0xf]
        %v694 = vld [vmem:[%s632 + $0xf4] sm:$0xf]
        %v695 = vld [vmem:[%s632 + $0xf8] sm:$0xf]
        %v696 = vld [vmem:[%s632 + $0xfc] sm:$0xf]
        %v697 = vld [vmem:[%s632 + $0x100] sm:$0xf]
        %v698 = vld [vmem:[%s632 + $0x104] sm:$0xf]
        %v699 = vld [vmem:[%s632 + $0x108] sm:$0xf]
        %v700 = vld [vmem:[%s632 + $0x10c] sm:$0xf]
        %v701 = vld [vmem:[%s632 + $0x110] sm:$0xf]
        %v702 = vld [vmem:[%s632 + $0x114] sm:$0xf]
        %v703 = vld [vmem:[%s632 + $0x118] sm:$0xf]
        %v704 = vld [vmem:[%s632 + $0x11c] sm:$0xf]
        %v705 = vld [vmem:[%s632 + $0x120] sm:$0xf]
        %v706 = vld [vmem:[%s632 + $0x124] sm:$0xf]
        %v707 = vld [vmem:[%s632 + $0x128] sm:$0xf]
        %v708 = vld [vmem:[%s632 + $0x12c] sm:$0xf]
        %v709 = vld [vmem:[%s632 + $0x130] sm:$0xf]
        %v710 = vld [vmem:[%s632 + $0x134] sm:$0xf]
        %v711 = vld [vmem:[%s632 + $0x138] sm:$0xf]
        %v712 = vld [vmem:[%s632 + $0x13c] sm:$0xf]
        %s713 = scalar_lea.vmem %s2, 1
        %v714 = vld [vmem:[%s713] sm:$0x1]
        %v716 = vperm.slane %v714, 0
        %v798 = vunpack.c.l.b16 %v633
        %v799 = vunpack.c.l.b16 %v634
        %v800 = vunpack.c.l.b16 %v635
        %v801 = vunpack.c.l.b16 %v636
        %v802 = vunpack.c.l.b16 %v637
        %v803 = vunpack.c.l.b16 %v638
        %v804 = vunpack.c.l.b16 %v639
        %v805 = vunpack.c.l.b16 %v640
        %v806 = vunpack.c.l.b16 %v641
        %v807 = vunpack.c.l.b16 %v642
        %v808 = vunpack.c.l.b16 %v643
        %v809 = vunpack.c.l.b16 %v644
        %v810 = vunpack.c.l.b16 %v645
        %v811 = vunpack.c.l.b16 %v646
        %v812 = vunpack.c.l.b16 %v647
        %v813 = vunpack.c.l.b16 %v648
        %v814 = vunpack.c.l.b16 %v649
        %v815 = vunpack.c.l.b16 %v650
        %v816 = vunpack.c.l.b16 %v651
        %v817 = vunpack.c.l.b16 %v652
        %v818 = vunpack.c.l.b16 %v653
        %v819 = vunpack.c.l.b16 %v654
        %v820 = vunpack.c.l.b16 %v655
        %v821 = vunpack.c.l.b16 %v656
        %v822 = vunpack.c.l.b16 %v657
        %v823 = vunpack.c.l.b16 %v658
        %v824 = vunpack.c.l.b16 %v659
        %v825 = vunpack.c.l.b16 %v660
        %v826 = vunpack.c.l.b16 %v661
        %v827 = vunpack.c.l.b16 %v662
        %v828 = vunpack.c.l.b16 %v663
        %v829 = vunpack.c.l.b16 %v664
        %v830 = vunpack.c.l.b16 %v665
        %v831 = vunpack.c.l.b16 %v666
        %v832 = vunpack.c.l.b16 %v667
        %v833 = vunpack.c.l.b16 %v668
        %v834 = vunpack.c.l.b16 %v669
        %v835 = vunpack.c.l.b16 %v670
        %v836 = vunpack.c.l.b16 %v671
        %v837 = vunpack.c.l.b16 %v672
        %v838 = vunpack.c.l.b16 %v673
        %v839 = vunpack.c.l.b16 %v674
        %v840 = vunpack.c.l.b16 %v675
        %v841 = vunpack.c.l.b16 %v676
        %v842 = vunpack.c.l.b16 %v677
        %v843 = vunpack.c.l.b16 %v678
        %v844 = vunpack.c.l.b16 %v679
        %v845 = vunpack.c.l.b16 %v680
        %v846 = vunpack.c.l.b16 %v681
        %v847 = vunpack.c.l.b16 %v682
        %v848 = vunpack.c.l.b16 %v683
        %v849 = vunpack.c.l.b16 %v684
        %v850 = vunpack.c.l.b16 %v685
        %v851 = vunpack.c.l.b16 %v686
        %v852 = vunpack.c.l.b16 %v687
        %v853 = vunpack.c.l.b16 %v688
        %v854 = vunpack.c.l.b16 %v689
        %v855 = vunpack.c.l.b16 %v690
        %v856 = vunpack.c.l.b16 %v691
        %v857 = vunpack.c.l.b16 %v692
        %v858 = vunpack.c.l.b16 %v693
        %v859 = vunpack.c.l.b16 %v694
        %v860 = vunpack.c.l.b16 %v695
        %v861 = vunpack.c.l.b16 %v696
        %v862 = vunpack.c.l.b16 %v697
        %v863 = vunpack.c.l.b16 %v698
        %v864 = vunpack.c.l.b16 %v699
        %v865 = vunpack.c.l.b16 %v700
        %v866 = vunpack.c.l.b16 %v701
        %v867 = vunpack.c.l.b16 %v702
        %v868 = vunpack.c.l.b16 %v703
        %v869 = vunpack.c.l.b16 %v704
        %v870 = vunpack.c.l.b16 %v705
        %v871 = vunpack.c.l.b16 %v706
        %v872 = vunpack.c.l.b16 %v707
        %v873 = vunpack.c.l.b16 %v708
        %v874 = vunpack.c.l.b16 %v709
        %v875 = vunpack.c.l.b16 %v710
        %v876 = vunpack.c.l.b16 %v711
        %v877 = vunpack.c.l.b16 %v712
        %v878 = vpack.c.b16 %v799, %v798
        %v879 = vpack.c.b16 %v801, %v800
        %v880 = vpack.c.b16 %v803, %v802
        %v881 = vpack.c.b16 %v805, %v804
        %v882 = vpack.c.b16 %v807, %v806
        %v883 = vpack.c.b16 %v809, %v808
        %v884 = vpack.c.b16 %v811, %v810
        %v885 = vpack.c.b16 %v813, %v812
        %v886 = vpack.c.b16 %v815, %v814
        %v887 = vpack.c.b16 %v817, %v816
        %v888 = vpack.c.b16 %v819, %v818
        %v889 = vpack.c.b16 %v821, %v820
        %v890 = vpack.c.b16 %v823, %v822
        %v891 = vpack.c.b16 %v825, %v824
        %v892 = vpack.c.b16 %v827, %v826
        %v893 = vpack.c.b16 %v829, %v828
        %v894 = vpack.c.b16 %v831, %v830
        %v895 = vpack.c.b16 %v833, %v832
        %v896 = vpack.c.b16 %v835, %v834
        %v897 = vpack.c.b16 %v837, %v836
        %v898 = vpack.c.b16 %v839, %v838
        %v899 = vpack.c.b16 %v841, %v840
        %v900 = vpack.c.b16 %v843, %v842
        %v901 = vpack.c.b16 %v845, %v844
        %v902 = vpack.c.b16 %v847, %v846
        %v903 = vpack.c.b16 %v849, %v848
        %v904 = vpack.c.b16 %v851, %v850
        %v905 = vpack.c.b16 %v853, %v852
        %v906 = vpack.c.b16 %v855, %v854
        %v907 = vpack.c.b16 %v857, %v856
        %v908 = vpack.c.b16 %v859, %v858
        %v909 = vpack.c.b16 %v861, %v860
        %v910 = vpack.c.b16 %v863, %v862
        %v911 = vpack.c.b16 %v865, %v864
        %v912 = vpack.c.b16 %v867, %v866
        %v913 = vpack.c.b16 %v869, %v868
        %v914 = vpack.c.b16 %v871, %v870
        %v915 = vpack.c.b16 %v873, %v872
        %v916 = vpack.c.b16 %v875, %v874
        %v917 = vpack.c.b16 %v877, %v876
        %958 = vmatpush.bf16.msra.mxu0 %v885
        %959 = vmatpush.bf16.msra.mxu0 %v884
        %960 = vmatpush.bf16.msra.mxu0 %v883
        %961 = vmatpush.bf16.msra.mxu0 %v882
        %962 = vmatpush.bf16.msra.mxu0 %v881
        %963 = vmatpush.bf16.msra.mxu0 %v880
        %964 = vmatpush.bf16.msra.mxu0 %v879
        %965 = vmatpush.bf16.msra.mxu0 %v878
        %966 = vmatmul.bf16.gmra.mxu0 %v627
        %v967 = vpop.f32.mrf.mxu0
        %v968 = vadd.f32 %v716, %v967
        %v969 = vpop.f32.mrf.mxu0
        %970 = vdwg.mxu0
        %971 = vmatpush.bf16.msra.mxu0 %v893
        %972 = vmatpush.bf16.msra.mxu0 %v892
        %973 = vmatpush.bf16.msra.mxu0 %v891
        %974 = vmatpush.bf16.msra.mxu0 %v890
        %975 = vmatpush.bf16.msra.mxu0 %v889
        %976 = vmatpush.bf16.msra.mxu0 %v888
        %977 = vmatpush.bf16.msra.mxu0 %v887
        %978 = vmatpush.bf16.msra.mxu0 %v886
        %979 = vmatmul.bf16.gmra.mxu0 %v628
        %v980 = vpop.f32.mrf.mxu0
        %v981 = vadd.f32 %v968, %v980
        %v982 = vpop.f32.mrf.mxu0
        %983 = vdwg.mxu0
        %984 = vmatpush.bf16.msra.mxu0 %v901
        %985 = vmatpush.bf16.msra.mxu0 %v900
        %986 = vmatpush.bf16.msra.mxu0 %v899
        %987 = vmatpush.bf16.msra.mxu0 %v898
        %988 = vmatpush.bf16.msra.mxu0 %v897
        %989 = vmatpush.bf16.msra.mxu0 %v896
        %990 = vmatpush.bf16.msra.mxu0 %v895
        %991 = vmatpush.bf16.msra.mxu0 %v894
        %992 = vmatmul.bf16.gmra.mxu0 %v629
        %v993 = vpop.f32.mrf.mxu0
        %v994 = vadd.f32 %v981, %v993
        %v995 = vpop.f32.mrf.mxu0
        %996 = vdwg.mxu0
        %997 = vmatpush.bf16.msra.mxu0 %v909
        %998 = vmatpush.bf16.msra.mxu0 %v908
        %999 = vmatpush.bf16.msra.mxu0 %v907
        %1000 = vmatpush.bf16.msra.mxu0 %v906
        %1001 = vmatpush.bf16.msra.mxu0 %v905
        %1002 = vmatpush.bf16.msra.mxu0 %v904
        %1003 = vmatpush.bf16.msra.mxu0 %v903
        %1004 = vmatpush.bf16.msra.mxu0 %v902
        %1005 = vmatmul.bf16.gmra.mxu0 %v630
        %v1006 = vpop.f32.mrf.mxu0
        %v1007 = vadd.f32 %v994, %v1006
        %v1008 = vpop.f32.mrf.mxu0
        %1009 = vdwg.mxu0
        %1010 = vmatpush.bf16.msra.mxu0 %v917
        %1011 = vmatpush.bf16.msra.mxu0 %v916
        %1012 = vmatpush.bf16.msra.mxu0 %v915
        %1013 = vmatpush.bf16.msra.mxu0 %v914
        %1014 = vmatpush.bf16.msra.mxu0 %v913
        %1015 = vmatpush.bf16.msra.mxu0 %v912
        %1016 = vmatpush.bf16.msra.mxu0 %v911
        %1017 = vmatpush.bf16.msra.mxu0 %v910
        %1018 = vmatmul.bf16.gmra.mxu0 %v631
        %v1019 = vpop.f32.mrf.mxu0
        %v1020 = vadd.f32 %v1007, %v1019
        %v1021 = vpop.f32.mrf.mxu0
        %1022 = vdwg.mxu0
        %v1023 = vtanh.pop %v1020
        %1024 = vst [vmem:[#allocation2 + $0x2] sm:$0xff] %v1023
        %v1025 = vld [vmem:[#allocation2] sm:$0xff]
        %v1026 = vld [vmem:[#allocation2 + $0x8] sm:$0xf]
        %v1029 = vrot.slane %v1025, 1
        %v1030 = vrot.slane %v1026, 1
        %v1031 = vsel %vm191, %v1029, %v1030
        %v1033 = vrot.slane %v1025, 2
        %v1034 = vrot.slane %v1026, 2
        %v1035 = vsel %vm196, %v1033, %v1034
        %v1037 = vrot.slane %v1025, 3
        %v1038 = vrot.slane %v1026, 3
        %v1039 = vsel %vm201, %v1037, %v1038
        %v1041 = vrot.slane %v1025, 4
        %v1042 = vrot.slane %v1026, 4
        %v1043 = vsel %vm206, %v1041, %v1042
        %v1045 = vpack.c.bf16 %v1025, %v1025
        %v1046 = vpack.c.bf16 %v1031, %v1031
        %v1047 = vpack.c.bf16 %v1035, %v1035
        %v1048 = vpack.c.bf16 %v1039, %v1039
        %v1049 = vpack.c.bf16 %v1043, %v1043
        %s1050 = scalar_lea.vmem [#allocation3], 640
        %v1051 = vld [vmem:[%s1050] sm:$0xf]
        %v1052 = vld [vmem:[%s1050 + $0x4] sm:$0xf]
        %v1053 = vld [vmem:[%s1050 + $0x8] sm:$0xf]
        %v1054 = vld [vmem:[%s1050 + $0xc] sm:$0xf]
        %v1055 = vld [vmem:[%s1050 + $0x10] sm:$0xf]
        %v1056 = vld [vmem:[%s1050 + $0x14] sm:$0xf]
        %v1057 = vld [vmem:[%s1050 + $0x18] sm:$0xf]
        %v1058 = vld [vmem:[%s1050 + $0x1c] sm:$0xf]
        %v1059 = vld [vmem:[%s1050 + $0x20] sm:$0xf]
        %v1060 = vld [vmem:[%s1050 + $0x24] sm:$0xf]
        %v1061 = vld [vmem:[%s1050 + $0x28] sm:$0xf]
        %v1062 = vld [vmem:[%s1050 + $0x2c] sm:$0xf]
        %v1063 = vld [vmem:[%s1050 + $0x30] sm:$0xf]
        %v1064 = vld [vmem:[%s1050 + $0x34] sm:$0xf]
        %v1065 = vld [vmem:[%s1050 + $0x38] sm:$0xf]
        %v1066 = vld [vmem:[%s1050 + $0x3c] sm:$0xf]
        %v1067 = vld [vmem:[%s1050 + $0x40] sm:$0xf]
        %v1068 = vld [vmem:[%s1050 + $0x44] sm:$0xf]
        %v1069 = vld [vmem:[%s1050 + $0x48] sm:$0xf]
        %v1070 = vld [vmem:[%s1050 + $0x4c] sm:$0xf]
        %v1071 = vld [vmem:[%s1050 + $0x50] sm:$0xf]
        %v1072 = vld [vmem:[%s1050 + $0x54] sm:$0xf]
        %v1073 = vld [vmem:[%s1050 + $0x58] sm:$0xf]
        %v1074 = vld [vmem:[%s1050 + $0x5c] sm:$0xf]
        %v1075 = vld [vmem:[%s1050 + $0x60] sm:$0xf]
        %v1076 = vld [vmem:[%s1050 + $0x64] sm:$0xf]
        %v1077 = vld [vmem:[%s1050 + $0x68] sm:$0xf]
        %v1078 = vld [vmem:[%s1050 + $0x6c] sm:$0xf]
        %v1079 = vld [vmem:[%s1050 + $0x70] sm:$0xf]
        %v1080 = vld [vmem:[%s1050 + $0x74] sm:$0xf]
        %v1081 = vld [vmem:[%s1050 + $0x78] sm:$0xf]
        %v1082 = vld [vmem:[%s1050 + $0x7c] sm:$0xf]
        %v1083 = vld [vmem:[%s1050 + $0x80] sm:$0xf]
        %v1084 = vld [vmem:[%s1050 + $0x84] sm:$0xf]
        %v1085 = vld [vmem:[%s1050 + $0x88] sm:$0xf]
        %v1086 = vld [vmem:[%s1050 + $0x8c] sm:$0xf]
        %v1087 = vld [vmem:[%s1050 + $0x90] sm:$0xf]
        %v1088 = vld [vmem:[%s1050 + $0x94] sm:$0xf]
        %v1089 = vld [vmem:[%s1050 + $0x98] sm:$0xf]
        %v1090 = vld [vmem:[%s1050 + $0x9c] sm:$0xf]
        %v1091 = vld [vmem:[%s1050 + $0xa0] sm:$0xf]
        %v1092 = vld [vmem:[%s1050 + $0xa4] sm:$0xf]
        %v1093 = vld [vmem:[%s1050 + $0xa8] sm:$0xf]
        %v1094 = vld [vmem:[%s1050 + $0xac] sm:$0xf]
        %v1095 = vld [vmem:[%s1050 + $0xb0] sm:$0xf]
        %v1096 = vld [vmem:[%s1050 + $0xb4] sm:$0xf]
        %v1097 = vld [vmem:[%s1050 + $0xb8] sm:$0xf]
        %v1098 = vld [vmem:[%s1050 + $0xbc] sm:$0xf]
        %v1099 = vld [vmem:[%s1050 + $0xc0] sm:$0xf]
        %v1100 = vld [vmem:[%s1050 + $0xc4] sm:$0xf]
        %v1101 = vld [vmem:[%s1050 + $0xc8] sm:$0xf]
        %v1102 = vld [vmem:[%s1050 + $0xcc] sm:$0xf]
        %v1103 = vld [vmem:[%s1050 + $0xd0] sm:$0xf]
        %v1104 = vld [vmem:[%s1050 + $0xd4] sm:$0xf]
        %v1105 = vld [vmem:[%s1050 + $0xd8] sm:$0xf]
        %v1106 = vld [vmem:[%s1050 + $0xdc] sm:$0xf]
        %v1107 = vld [vmem:[%s1050 + $0xe0] sm:$0xf]
        %v1108 = vld [vmem:[%s1050 + $0xe4] sm:$0xf]
        %v1109 = vld [vmem:[%s1050 + $0xe8] sm:$0xf]
        %v1110 = vld [vmem:[%s1050 + $0xec] sm:$0xf]
        %v1111 = vld [vmem:[%s1050 + $0xf0] sm:$0xf]
        %v1112 = vld [vmem:[%s1050 + $0xf4] sm:$0xf]
        %v1113 = vld [vmem:[%s1050 + $0xf8] sm:$0xf]
        %v1114 = vld [vmem:[%s1050 + $0xfc] sm:$0xf]
        %v1115 = vld [vmem:[%s1050 + $0x100] sm:$0xf]
        %v1116 = vld [vmem:[%s1050 + $0x104] sm:$0xf]
        %v1117 = vld [vmem:[%s1050 + $0x108] sm:$0xf]
        %v1118 = vld [vmem:[%s1050 + $0x10c] sm:$0xf]
        %v1119 = vld [vmem:[%s1050 + $0x110] sm:$0xf]
        %v1120 = vld [vmem:[%s1050 + $0x114] sm:$0xf]
        %v1121 = vld [vmem:[%s1050 + $0x118] sm:$0xf]
        %v1122 = vld [vmem:[%s1050 + $0x11c] sm:$0xf]
        %v1123 = vld [vmem:[%s1050 + $0x120] sm:$0xf]
        %v1124 = vld [vmem:[%s1050 + $0x124] sm:$0xf]
        %v1125 = vld [vmem:[%s1050 + $0x128] sm:$0xf]
        %v1126 = vld [vmem:[%s1050 + $0x12c] sm:$0xf]
        %v1127 = vld [vmem:[%s1050 + $0x130] sm:$0xf]
        %v1128 = vld [vmem:[%s1050 + $0x134] sm:$0xf]
        %v1129 = vld [vmem:[%s1050 + $0x138] sm:$0xf]
        %v1130 = vld [vmem:[%s1050 + $0x13c] sm:$0xf]
        %s1131 = scalar_lea.vmem %s2, 2
        %v1132 = vld [vmem:[%s1131] sm:$0x1]
        %v1134 = vperm.slane %v1132, 0
        %v1216 = vunpack.c.l.b16 %v1051
        %v1217 = vunpack.c.l.b16 %v1052
        %v1218 = vunpack.c.l.b16 %v1053
        %v1219 = vunpack.c.l.b16 %v1054
        %v1220 = vunpack.c.l.b16 %v1055
        %v1221 = vunpack.c.l.b16 %v1056
        %v1222 = vunpack.c.l.b16 %v1057
        %v1223 = vunpack.c.l.b16 %v1058
        %v1224 = vunpack.c.l.b16 %v1059
        %v1225 = vunpack.c.l.b16 %v1060
        %v1226 = vunpack.c.l.b16 %v1061
        %v1227 = vunpack.c.l.b16 %v1062
        %v1228 = vunpack.c.l.b16 %v1063
        %v1229 = vunpack.c.l.b16 %v1064
        %v1230 = vunpack.c.l.b16 %v1065
        %v1231 = vunpack.c.l.b16 %v1066
        %v1232 = vunpack.c.l.b16 %v1067
        %v1233 = vunpack.c.l.b16 %v1068
        %v1234 = vunpack.c.l.b16 %v1069
        %v1235 = vunpack.c.l.b16 %v1070
        %v1236 = vunpack.c.l.b16 %v1071
        %v1237 = vunpack.c.l.b16 %v1072
        %v1238 = vunpack.c.l.b16 %v1073
        %v1239 = vunpack.c.l.b16 %v1074
        %v1240 = vunpack.c.l.b16 %v1075
        %v1241 = vunpack.c.l.b16 %v1076
        %v1242 = vunpack.c.l.b16 %v1077
        %v1243 = vunpack.c.l.b16 %v1078
        %v1244 = vunpack.c.l.b16 %v1079
        %v1245 = vunpack.c.l.b16 %v1080
        %v1246 = vunpack.c.l.b16 %v1081
        %v1247 = vunpack.c.l.b16 %v1082
        %v1248 = vunpack.c.l.b16 %v1083
        %v1249 = vunpack.c.l.b16 %v1084
        %v1250 = vunpack.c.l.b16 %v1085
        %v1251 = vunpack.c.l.b16 %v1086
        %v1252 = vunpack.c.l.b16 %v1087
        %v1253 = vunpack.c.l.b16 %v1088
        %v1254 = vunpack.c.l.b16 %v1089
        %v1255 = vunpack.c.l.b16 %v1090
        %v1256 = vunpack.c.l.b16 %v1091
        %v1257 = vunpack.c.l.b16 %v1092
        %v1258 = vunpack.c.l.b16 %v1093
        %v1259 = vunpack.c.l.b16 %v1094
        %v1260 = vunpack.c.l.b16 %v1095
        %v1261 = vunpack.c.l.b16 %v1096
        %v1262 = vunpack.c.l.b16 %v1097
        %v1263 = vunpack.c.l.b16 %v1098
        %v1264 = vunpack.c.l.b16 %v1099
        %v1265 = vunpack.c.l.b16 %v1100
        %v1266 = vunpack.c.l.b16 %v1101
        %v1267 = vunpack.c.l.b16 %v1102
        %v1268 = vunpack.c.l.b16 %v1103
        %v1269 = vunpack.c.l.b16 %v1104
        %v1270 = vunpack.c.l.b16 %v1105
        %v1271 = vunpack.c.l.b16 %v1106
        %v1272 = vunpack.c.l.b16 %v1107
        %v1273 = vunpack.c.l.b16 %v1108
        %v1274 = vunpack.c.l.b16 %v1109
        %v1275 = vunpack.c.l.b16 %v1110
        %v1276 = vunpack.c.l.b16 %v1111
        %v1277 = vunpack.c.l.b16 %v1112
        %v1278 = vunpack.c.l.b16 %v1113
        %v1279 = vunpack.c.l.b16 %v1114
        %v1280 = vunpack.c.l.b16 %v1115
        %v1281 = vunpack.c.l.b16 %v1116
        %v1282 = vunpack.c.l.b16 %v1117
        %v1283 = vunpack.c.l.b16 %v1118
        %v1284 = vunpack.c.l.b16 %v1119
        %v1285 = vunpack.c.l.b16 %v1120
        %v1286 = vunpack.c.l.b16 %v1121
        %v1287 = vunpack.c.l.b16 %v1122
        %v1288 = vunpack.c.l.b16 %v1123
        %v1289 = vunpack.c.l.b16 %v1124
        %v1290 = vunpack.c.l.b16 %v1125
        %v1291 = vunpack.c.l.b16 %v1126
        %v1292 = vunpack.c.l.b16 %v1127
        %v1293 = vunpack.c.l.b16 %v1128
        %v1294 = vunpack.c.l.b16 %v1129
        %v1295 = vunpack.c.l.b16 %v1130
        %v1296 = vpack.c.b16 %v1217, %v1216
        %v1297 = vpack.c.b16 %v1219, %v1218
        %v1298 = vpack.c.b16 %v1221, %v1220
        %v1299 = vpack.c.b16 %v1223, %v1222
        %v1300 = vpack.c.b16 %v1225, %v1224
        %v1301 = vpack.c.b16 %v1227, %v1226
        %v1302 = vpack.c.b16 %v1229, %v1228
        %v1303 = vpack.c.b16 %v1231, %v1230
        %v1304 = vpack.c.b16 %v1233, %v1232
        %v1305 = vpack.c.b16 %v1235, %v1234
        %v1306 = vpack.c.b16 %v1237, %v1236
        %v1307 = vpack.c.b16 %v1239, %v1238
        %v1308 = vpack.c.b16 %v1241, %v1240
        %v1309 = vpack.c.b16 %v1243, %v1242
        %v1310 = vpack.c.b16 %v1245, %v1244
        %v1311 = vpack.c.b16 %v1247, %v1246
        %v1312 = vpack.c.b16 %v1249, %v1248
        %v1313 = vpack.c.b16 %v1251, %v1250
        %v1314 = vpack.c.b16 %v1253, %v1252
        %v1315 = vpack.c.b16 %v1255, %v1254
        %v1316 = vpack.c.b16 %v1257, %v1256
        %v1317 = vpack.c.b16 %v1259, %v1258
        %v1318 = vpack.c.b16 %v1261, %v1260
        %v1319 = vpack.c.b16 %v1263, %v1262
        %v1320 = vpack.c.b16 %v1265, %v1264
        %v1321 = vpack.c.b16 %v1267, %v1266
        %v1322 = vpack.c.b16 %v1269, %v1268
        %v1323 = vpack.c.b16 %v1271, %v1270
        %v1324 = vpack.c.b16 %v1273, %v1272
        %v1325 = vpack.c.b16 %v1275, %v1274
        %v1326 = vpack.c.b16 %v1277, %v1276
        %v1327 = vpack.c.b16 %v1279, %v1278
        %v1328 = vpack.c.b16 %v1281, %v1280
        %v1329 = vpack.c.b16 %v1283, %v1282
        %v1330 = vpack.c.b16 %v1285, %v1284
        %v1331 = vpack.c.b16 %v1287, %v1286
        %v1332 = vpack.c.b16 %v1289, %v1288
        %v1333 = vpack.c.b16 %v1291, %v1290
        %v1334 = vpack.c.b16 %v1293, %v1292
        %v1335 = vpack.c.b16 %v1295, %v1294
        %1376 = vmatpush.bf16.msra.mxu0 %v1303
        %1377 = vmatpush.bf16.msra.mxu0 %v1302
        %1378 = vmatpush.bf16.msra.mxu0 %v1301
        %1379 = vmatpush.bf16.msra.mxu0 %v1300
        %1380 = vmatpush.bf16.msra.mxu0 %v1299
        %1381 = vmatpush.bf16.msra.mxu0 %v1298
        %1382 = vmatpush.bf16.msra.mxu0 %v1297
        %1383 = vmatpush.bf16.msra.mxu0 %v1296
        %1384 = vmatmul.bf16.gmra.mxu0 %v1045
        %v1385 = vpop.f32.mrf.mxu0
        %v1386 = vadd.f32 %v1134, %v1385
        %v1387 = vpop.f32.mrf.mxu0
        %1388 = vdwg.mxu0
        %1389 = vmatpush.bf16.msra.mxu0 %v1311
        %1390 = vmatpush.bf16.msra.mxu0 %v1310
        %1391 = vmatpush.bf16.msra.mxu0 %v1309
        %1392 = vmatpush.bf16.msra.mxu0 %v1308
        %1393 = vmatpush.bf16.msra.mxu0 %v1307
        %1394 = vmatpush.bf16.msra.mxu0 %v1306
        %1395 = vmatpush.bf16.msra.mxu0 %v1305
        %1396 = vmatpush.bf16.msra.mxu0 %v1304
        %1397 = vmatmul.bf16.gmra.mxu0 %v1046
        %v1398 = vpop.f32.mrf.mxu0
        %v1399 = vadd.f32 %v1386, %v1398
        %v1400 = vpop.f32.mrf.mxu0
        %1401 = vdwg.mxu0
        %1402 = vmatpush.bf16.msra.mxu0 %v1319
        %1403 = vmatpush.bf16.msra.mxu0 %v1318
        %1404 = vmatpush.bf16.msra.mxu0 %v1317
        %1405 = vmatpush.bf16.msra.mxu0 %v1316
        %1406 = vmatpush.bf16.msra.mxu0 %v1315
        %1407 = vmatpush.bf16.msra.mxu0 %v1314
        %1408 = vmatpush.bf16.msra.mxu0 %v1313
        %1409 = vmatpush.bf16.msra.mxu0 %v1312
        %1410 = vmatmul.bf16.gmra.mxu0 %v1047
        %v1411 = vpop.f32.mrf.mxu0
        %v1412 = vadd.f32 %v1399, %v1411
        %v1413 = vpop.f32.mrf.mxu0
        %1414 = vdwg.mxu0
        %1415 = vmatpush.bf16.msra.mxu0 %v1327
        %1416 = vmatpush.bf16.msra.mxu0 %v1326
        %1417 = vmatpush.bf16.msra.mxu0 %v1325
        %1418 = vmatpush.bf16.msra.mxu0 %v1324
        %1419 = vmatpush.bf16.msra.mxu0 %v1323
        %1420 = vmatpush.bf16.msra.mxu0 %v1322
        %1421 = vmatpush.bf16.msra.mxu0 %v1321
        %1422 = vmatpush.bf16.msra.mxu0 %v1320
        %1423 = vmatmul.bf16.gmra.mxu0 %v1048
        %v1424 = vpop.f32.mrf.mxu0
        %v1425 = vadd.f32 %v1412, %v1424
        %v1426 = vpop.f32.mrf.mxu0
        %1427 = vdwg.mxu0
        %1428 = vmatpush.bf16.msra.mxu0 %v1335
        %1429 = vmatpush.bf16.msra.mxu0 %v1334
        %1430 = vmatpush.bf16.msra.mxu0 %v1333
        %1431 = vmatpush.bf16.msra.mxu0 %v1332
        %1432 = vmatpush.bf16.msra.mxu0 %v1331
        %1433 = vmatpush.bf16.msra.mxu0 %v1330
        %1434 = vmatpush.bf16.msra.mxu0 %v1329
        %1435 = vmatpush.bf16.msra.mxu0 %v1328
        %1436 = vmatmul.bf16.gmra.mxu0 %v1049
        %v1437 = vpop.f32.mrf.mxu0
        %v1438 = vadd.f32 %v1425, %v1437
        %v1439 = vpop.f32.mrf.mxu0
        %1440 = vdwg.mxu0
        %v1441 = vtanh.pop %v1438
        %1442 = vst [vmem:[#allocation2 + $0x2] sm:$0xff] %v1441
        %v1443 = vld [vmem:[#allocation2] sm:$0xff]
        %v1444 = vld [vmem:[#allocation2 + $0x8] sm:$0xf]
        %v1447 = vrot.slane %v1443, 1
        %v1448 = vrot.slane %v1444, 1
        %v1449 = vsel %vm191, %v1447, %v1448
        %v1451 = vrot.slane %v1443, 2
        %v1452 = vrot.slane %v1444, 2
        %v1453 = vsel %vm196, %v1451, %v1452
        %v1455 = vrot.slane %v1443, 3
        %v1456 = vrot.slane %v1444, 3
        %v1457 = vsel %vm201, %v1455, %v1456
        %v1459 = vrot.slane %v1443, 4
        %v1460 = vrot.slane %v1444, 4
        %v1461 = vsel %vm206, %v1459, %v1460
        %v1463 = vpack.c.bf16 %v1443, %v1443
        %v1464 = vpack.c.bf16 %v1449, %v1449
        %v1465 = vpack.c.bf16 %v1453, %v1453
        %v1466 = vpack.c.bf16 %v1457, %v1457
        %v1467 = vpack.c.bf16 %v1461, %v1461
        %s1468 = scalar_lea.vmem [#allocation3], 960
        %v1469 = vld [vmem:[%s1468] sm:$0xf]
        %v1470 = vld [vmem:[%s1468 + $0x4] sm:$0xf]
        %v1471 = vld [vmem:[%s1468 + $0x8] sm:$0xf]
        %v1472 = vld [vmem:[%s1468 + $0xc] sm:$0xf]
        %v1473 = vld [vmem:[%s1468 + $0x10] sm:$0xf]
        %v1474 = vld [vmem:[%s1468 + $0x14] sm:$0xf]
        %v1475 = vld [vmem:[%s1468 + $0x18] sm:$0xf]
        %v1476 = vld [vmem:[%s1468 + $0x1c] sm:$0xf]
        %v1477 = vld [vmem:[%s1468 + $0x20] sm:$0xf]
        %v1478 = vld [vmem:[%s1468 + $0x24] sm:$0xf]
        %v1479 = vld [vmem:[%s1468 + $0x28] sm:$0xf]
        %v1480 = vld [vmem:[%s1468 + $0x2c] sm:$0xf]
        %v1481 = vld [vmem:[%s1468 + $0x30] sm:$0xf]
        %v1482 = vld [vmem:[%s1468 + $0x34] sm:$0xf]
        %v1483 = vld [vmem:[%s1468 + $0x38] sm:$0xf]
        %v1484 = vld [vmem:[%s1468 + $0x3c] sm:$0xf]
        %v1485 = vld [vmem:[%s1468 + $0x40] sm:$0xf]
        %v1486 = vld [vmem:[%s1468 + $0x44] sm:$0xf]
        %v1487 = vld [vmem:[%s1468 + $0x48] sm:$0xf]
        %v1488 = vld [vmem:[%s1468 + $0x4c] sm:$0xf]
        %v1489 = vld [vmem:[%s1468 + $0x50] sm:$0xf]
        %v1490 = vld [vmem:[%s1468 + $0x54] sm:$0xf]
        %v1491 = vld [vmem:[%s1468 + $0x58] sm:$0xf]
        %v1492 = vld [vmem:[%s1468 + $0x5c] sm:$0xf]
        %v1493 = vld [vmem:[%s1468 + $0x60] sm:$0xf]
        %v1494 = vld [vmem:[%s1468 + $0x64] sm:$0xf]
        %v1495 = vld [vmem:[%s1468 + $0x68] sm:$0xf]
        %v1496 = vld [vmem:[%s1468 + $0x6c] sm:$0xf]
        %v1497 = vld [vmem:[%s1468 + $0x70] sm:$0xf]
        %v1498 = vld [vmem:[%s1468 + $0x74] sm:$0xf]
        %v1499 = vld [vmem:[%s1468 + $0x78] sm:$0xf]
        %v1500 = vld [vmem:[%s1468 + $0x7c] sm:$0xf]
        %v1501 = vld [vmem:[%s1468 + $0x80] sm:$0xf]
        %v1502 = vld [vmem:[%s1468 + $0x84] sm:$0xf]
        %v1503 = vld [vmem:[%s1468 + $0x88] sm:$0xf]
        %v1504 = vld [vmem:[%s1468 + $0x8c] sm:$0xf]
        %v1505 = vld [vmem:[%s1468 + $0x90] sm:$0xf]
        %v1506 = vld [vmem:[%s1468 + $0x94] sm:$0xf]
        %v1507 = vld [vmem:[%s1468 + $0x98] sm:$0xf]
        %v1508 = vld [vmem:[%s1468 + $0x9c] sm:$0xf]
        %v1509 = vld [vmem:[%s1468 + $0xa0] sm:$0xf]
        %v1510 = vld [vmem:[%s1468 + $0xa4] sm:$0xf]
        %v1511 = vld [vmem:[%s1468 + $0xa8] sm:$0xf]
        %v1512 = vld [vmem:[%s1468 + $0xac] sm:$0xf]
        %v1513 = vld [vmem:[%s1468 + $0xb0] sm:$0xf]
        %v1514 = vld [vmem:[%s1468 + $0xb4] sm:$0xf]
        %v1515 = vld [vmem:[%s1468 + $0xb8] sm:$0xf]
        %v1516 = vld [vmem:[%s1468 + $0xbc] sm:$0xf]
        %v1517 = vld [vmem:[%s1468 + $0xc0] sm:$0xf]
        %v1518 = vld [vmem:[%s1468 + $0xc4] sm:$0xf]
        %v1519 = vld [vmem:[%s1468 + $0xc8] sm:$0xf]
        %v1520 = vld [vmem:[%s1468 + $0xcc] sm:$0xf]
        %v1521 = vld [vmem:[%s1468 + $0xd0] sm:$0xf]
        %v1522 = vld [vmem:[%s1468 + $0xd4] sm:$0xf]
        %v1523 = vld [vmem:[%s1468 + $0xd8] sm:$0xf]
        %v1524 = vld [vmem:[%s1468 + $0xdc] sm:$0xf]
        %v1525 = vld [vmem:[%s1468 + $0xe0] sm:$0xf]
        %v1526 = vld [vmem:[%s1468 + $0xe4] sm:$0xf]
        %v1527 = vld [vmem:[%s1468 + $0xe8] sm:$0xf]
        %v1528 = vld [vmem:[%s1468 + $0xec] sm:$0xf]
        %v1529 = vld [vmem:[%s1468 + $0xf0] sm:$0xf]
        %v1530 = vld [vmem:[%s1468 + $0xf4] sm:$0xf]
        %v1531 = vld [vmem:[%s1468 + $0xf8] sm:$0xf]
        %v1532 = vld [vmem:[%s1468 + $0xfc] sm:$0xf]
        %v1533 = vld [vmem:[%s1468 + $0x100] sm:$0xf]
        %v1534 = vld [vmem:[%s1468 + $0x104] sm:$0xf]
        %v1535 = vld [vmem:[%s1468 + $0x108] sm:$0xf]
        %v1536 = vld [vmem:[%s1468 + $0x10c] sm:$0xf]
        %v1537 = vld [vmem:[%s1468 + $0x110] sm:$0xf]
        %v1538 = vld [vmem:[%s1468 + $0x114] sm:$0xf]
        %v1539 = vld [vmem:[%s1468 + $0x118] sm:$0xf]
        %v1540 = vld [vmem:[%s1468 + $0x11c] sm:$0xf]
        %v1541 = vld [vmem:[%s1468 + $0x120] sm:$0xf]
        %v1542 = vld [vmem:[%s1468 + $0x124] sm:$0xf]
        %v1543 = vld [vmem:[%s1468 + $0x128] sm:$0xf]
        %v1544 = vld [vmem:[%s1468 + $0x12c] sm:$0xf]
        %v1545 = vld [vmem:[%s1468 + $0x130] sm:$0xf]
        %v1546 = vld [vmem:[%s1468 + $0x134] sm:$0xf]
        %v1547 = vld [vmem:[%s1468 + $0x138] sm:$0xf]
        %v1548 = vld [vmem:[%s1468 + $0x13c] sm:$0xf]
        %s1549 = scalar_lea.vmem %s2, 3
        %v1550 = vld [vmem:[%s1549] sm:$0x1]
        %v1552 = vperm.slane %v1550, 0
        %v1634 = vunpack.c.l.b16 %v1469
        %v1635 = vunpack.c.l.b16 %v1470
        %v1636 = vunpack.c.l.b16 %v1471
        %v1637 = vunpack.c.l.b16 %v1472
        %v1638 = vunpack.c.l.b16 %v1473
        %v1639 = vunpack.c.l.b16 %v1474
        %v1640 = vunpack.c.l.b16 %v1475
        %v1641 = vunpack.c.l.b16 %v1476
        %v1642 = vunpack.c.l.b16 %v1477
        %v1643 = vunpack.c.l.b16 %v1478
        %v1644 = vunpack.c.l.b16 %v1479
        %v1645 = vunpack.c.l.b16 %v1480
        %v1646 = vunpack.c.l.b16 %v1481
        %v1647 = vunpack.c.l.b16 %v1482
        %v1648 = vunpack.c.l.b16 %v1483
        %v1649 = vunpack.c.l.b16 %v1484
        %v1650 = vunpack.c.l.b16 %v1485
        %v1651 = vunpack.c.l.b16 %v1486
        %v1652 = vunpack.c.l.b16 %v1487
        %v1653 = vunpack.c.l.b16 %v1488
        %v1654 = vunpack.c.l.b16 %v1489
        %v1655 = vunpack.c.l.b16 %v1490
        %v1656 = vunpack.c.l.b16 %v1491
        %v1657 = vunpack.c.l.b16 %v1492
        %v1658 = vunpack.c.l.b16 %v1493
        %v1659 = vunpack.c.l.b16 %v1494
        %v1660 = vunpack.c.l.b16 %v1495
        %v1661 = vunpack.c.l.b16 %v1496
        %v1662 = vunpack.c.l.b16 %v1497
        %v1663 = vunpack.c.l.b16 %v1498
        %v1664 = vunpack.c.l.b16 %v1499
        %v1665 = vunpack.c.l.b16 %v1500
        %v1666 = vunpack.c.l.b16 %v1501
        %v1667 = vunpack.c.l.b16 %v1502
        %v1668 = vunpack.c.l.b16 %v1503
        %v1669 = vunpack.c.l.b16 %v1504
        %v1670 = vunpack.c.l.b16 %v1505
        %v1671 = vunpack.c.l.b16 %v1506
        %v1672 = vunpack.c.l.b16 %v1507
        %v1673 = vunpack.c.l.b16 %v1508
        %v1674 = vunpack.c.l.b16 %v1509
        %v1675 = vunpack.c.l.b16 %v1510
        %v1676 = vunpack.c.l.b16 %v1511
        %v1677 = vunpack.c.l.b16 %v1512
        %v1678 = vunpack.c.l.b16 %v1513
        %v1679 = vunpack.c.l.b16 %v1514
        %v1680 = vunpack.c.l.b16 %v1515
        %v1681 = vunpack.c.l.b16 %v1516
        %v1682 = vunpack.c.l.b16 %v1517
        %v1683 = vunpack.c.l.b16 %v1518
        %v1684 = vunpack.c.l.b16 %v1519
        %v1685 = vunpack.c.l.b16 %v1520
        %v1686 = vunpack.c.l.b16 %v1521
        %v1687 = vunpack.c.l.b16 %v1522
        %v1688 = vunpack.c.l.b16 %v1523
        %v1689 = vunpack.c.l.b16 %v1524
        %v1690 = vunpack.c.l.b16 %v1525
        %v1691 = vunpack.c.l.b16 %v1526
        %v1692 = vunpack.c.l.b16 %v1527
        %v1693 = vunpack.c.l.b16 %v1528
        %v1694 = vunpack.c.l.b16 %v1529
        %v1695 = vunpack.c.l.b16 %v1530
        %v1696 = vunpack.c.l.b16 %v1531
        %v1697 = vunpack.c.l.b16 %v1532
        %v1698 = vunpack.c.l.b16 %v1533
        %v1699 = vunpack.c.l.b16 %v1534
        %v1700 = vunpack.c.l.b16 %v1535
        %v1701 = vunpack.c.l.b16 %v1536
        %v1702 = vunpack.c.l.b16 %v1537
        %v1703 = vunpack.c.l.b16 %v1538
        %v1704 = vunpack.c.l.b16 %v1539
        %v1705 = vunpack.c.l.b16 %v1540
        %v1706 = vunpack.c.l.b16 %v1541
        %v1707 = vunpack.c.l.b16 %v1542
        %v1708 = vunpack.c.l.b16 %v1543
        %v1709 = vunpack.c.l.b16 %v1544
        %v1710 = vunpack.c.l.b16 %v1545
        %v1711 = vunpack.c.l.b16 %v1546
        %v1712 = vunpack.c.l.b16 %v1547
        %v1713 = vunpack.c.l.b16 %v1548
        %v1714 = vpack.c.b16 %v1635, %v1634
        %v1715 = vpack.c.b16 %v1637, %v1636
        %v1716 = vpack.c.b16 %v1639, %v1638
        %v1717 = vpack.c.b16 %v1641, %v1640
        %v1718 = vpack.c.b16 %v1643, %v1642
        %v1719 = vpack.c.b16 %v1645, %v1644
        %v1720 = vpack.c.b16 %v1647, %v1646
        %v1721 = vpack.c.b16 %v1649, %v1648
        %v1722 = vpack.c.b16 %v1651, %v1650
        %v1723 = vpack.c.b16 %v1653, %v1652
        %v1724 = vpack.c.b16 %v1655, %v1654
        %v1725 = vpack.c.b16 %v1657, %v1656
        %v1726 = vpack.c.b16 %v1659, %v1658
        %v1727 = vpack.c.b16 %v1661, %v1660
        %v1728 = vpack.c.b16 %v1663, %v1662
        %v1729 = vpack.c.b16 %v1665, %v1664
        %v1730 = vpack.c.b16 %v1667, %v1666
        %v1731 = vpack.c.b16 %v1669, %v1668
        %v1732 = vpack.c.b16 %v1671, %v1670
        %v1733 = vpack.c.b16 %v1673, %v1672
        %v1734 = vpack.c.b16 %v1675, %v1674
        %v1735 = vpack.c.b16 %v1677, %v1676
        %v1736 = vpack.c.b16 %v1679, %v1678
        %v1737 = vpack.c.b16 %v1681, %v1680
        %v1738 = vpack.c.b16 %v1683, %v1682
        %v1739 = vpack.c.b16 %v1685, %v1684
        %v1740 = vpack.c.b16 %v1687, %v1686
        %v1741 = vpack.c.b16 %v1689, %v1688
        %v1742 = vpack.c.b16 %v1691, %v1690
        %v1743 = vpack.c.b16 %v1693, %v1692
        %v1744 = vpack.c.b16 %v1695, %v1694
        %v1745 = vpack.c.b16 %v1697, %v1696
        %v1746 = vpack.c.b16 %v1699, %v1698
        %v1747 = vpack.c.b16 %v1701, %v1700
        %v1748 = vpack.c.b16 %v1703, %v1702
        %v1749 = vpack.c.b16 %v1705, %v1704
        %v1750 = vpack.c.b16 %v1707, %v1706
        %v1751 = vpack.c.b16 %v1709, %v1708
        %v1752 = vpack.c.b16 %v1711, %v1710
        %v1753 = vpack.c.b16 %v1713, %v1712
        %1794 = vmatpush.bf16.msra.mxu0 %v1721
        %1795 = vmatpush.bf16.msra.mxu0 %v1720
        %1796 = vmatpush.bf16.msra.mxu0 %v1719
        %1797 = vmatpush.bf16.msra.mxu0 %v1718
        %1798 = vmatpush.bf16.msra.mxu0 %v1717
        %1799 = vmatpush.bf16.msra.mxu0 %v1716
        %1800 = vmatpush.bf16.msra.mxu0 %v1715
        %1801 = vmatpush.bf16.msra.mxu0 %v1714
        %1802 = vmatmul.bf16.gmra.mxu0 %v1463
        %v1803 = vpop.f32.mrf.mxu0
        %v1804 = vadd.f32 %v1552, %v1803
        %v1805 = vpop.f32.mrf.mxu0
        %1806 = vdwg.mxu0
        %1807 = vmatpush.bf16.msra.mxu0 %v1729
        %1808 = vmatpush.bf16.msra.mxu0 %v1728
        %1809 = vmatpush.bf16.msra.mxu0 %v1727
        %1810 = vmatpush.bf16.msra.mxu0 %v1726
        %1811 = vmatpush.bf16.msra.mxu0 %v1725
        %1812 = vmatpush.bf16.msra.mxu0 %v1724
        %1813 = vmatpush.bf16.msra.mxu0 %v1723
        %1814 = vmatpush.bf16.msra.mxu0 %v1722
        %1815 = vmatmul.bf16.gmra.mxu0 %v1464
        %v1816 = vpop.f32.mrf.mxu0
        %v1817 = vadd.f32 %v1804, %v1816
        %v1818 = vpop.f32.mrf.mxu0
        %1819 = vdwg.mxu0
        %1820 = vmatpush.bf16.msra.mxu0 %v1737
        %1821 = vmatpush.bf16.msra.mxu0 %v1736
        %1822 = vmatpush.bf16.msra.mxu0 %v1735
        %1823 = vmatpush.bf16.msra.mxu0 %v1734
        %1824 = vmatpush.bf16.msra.mxu0 %v1733
        %1825 = vmatpush.bf16.msra.mxu0 %v1732
        %1826 = vmatpush.bf16.msra.mxu0 %v1731
        %1827 = vmatpush.bf16.msra.mxu0 %v1730
        %1828 = vmatmul.bf16.gmra.mxu0 %v1465
        %v1829 = vpop.f32.mrf.mxu0
        %v1830 = vadd.f32 %v1817, %v1829
        %v1831 = vpop.f32.mrf.mxu0
        %1832 = vdwg.mxu0
        %1833 = vmatpush.bf16.msra.mxu0 %v1745
        %1834 = vmatpush.bf16.msra.mxu0 %v1744
        %1835 = vmatpush.bf16.msra.mxu0 %v1743
        %1836 = vmatpush.bf16.msra.mxu0 %v1742
        %1837 = vmatpush.bf16.msra.mxu0 %v1741
        %1838 = vmatpush.bf16.msra.mxu0 %v1740
        %1839 = vmatpush.bf16.msra.mxu0 %v1739
        %1840 = vmatpush.bf16.msra.mxu0 %v1738
        %1841 = vmatmul.bf16.gmra.mxu0 %v1466
        %v1842 = vpop.f32.mrf.mxu0
        %v1843 = vadd.f32 %v1830, %v1842
        %v1844 = vpop.f32.mrf.mxu0
        %1845 = vdwg.mxu0
        %1846 = vmatpush.bf16.msra.mxu0 %v1753
        %1847 = vmatpush.bf16.msra.mxu0 %v1752
        %1848 = vmatpush.bf16.msra.mxu0 %v1751
        %1849 = vmatpush.bf16.msra.mxu0 %v1750
        %1850 = vmatpush.bf16.msra.mxu0 %v1749
        %1851 = vmatpush.bf16.msra.mxu0 %v1748
        %1852 = vmatpush.bf16.msra.mxu0 %v1747
        %1853 = vmatpush.bf16.msra.mxu0 %v1746
        %1854 = vmatmul.bf16.gmra.mxu0 %v1467
        %v1855 = vpop.f32.mrf.mxu0
        %v1856 = vadd.f32 %v1843, %v1855
        %v1857 = vpop.f32.mrf.mxu0
        %1858 = vdwg.mxu0
        %v1859 = vtanh.pop %v1856
        %1860 = vst [vmem:[#allocation2 + $0x2] sm:$0xff] %v1859
        %v1861 = vld [vmem:[#allocation2] sm:$0xff]
        %v1862 = vld [vmem:[#allocation2 + $0x8] sm:$0xf]
        %v1865 = vrot.slane %v1861, 1
        %v1866 = vrot.slane %v1862, 1
        %v1867 = vsel %vm191, %v1865, %v1866
        %v1869 = vrot.slane %v1861, 2
        %v1870 = vrot.slane %v1862, 2
        %v1871 = vsel %vm196, %v1869, %v1870
        %v1873 = vrot.slane %v1861, 3
        %v1874 = vrot.slane %v1862, 3
        %v1875 = vsel %vm201, %v1873, %v1874
        %v1877 = vrot.slane %v1861, 4
        %v1878 = vrot.slane %v1862, 4
        %v1879 = vsel %vm206, %v1877, %v1878
        %v1881 = vpack.c.bf16 %v1861, %v1861
        %v1882 = vpack.c.bf16 %v1867, %v1867
        %v1883 = vpack.c.bf16 %v1871, %v1871
        %v1884 = vpack.c.bf16 %v1875, %v1875
        %v1885 = vpack.c.bf16 %v1879, %v1879
        %s1886 = scalar_lea.vmem [#allocation3], 1280
        %v1887 = vld [vmem:[%s1886] sm:$0xf]
        %v1888 = vld [vmem:[%s1886 + $0x4] sm:$0xf]
        %v1889 = vld [vmem:[%s1886 + $0x8] sm:$0xf]
        %v1890 = vld [vmem:[%s1886 + $0xc] sm:$0xf]
        %v1891 = vld [vmem:[%s1886 + $0x10] sm:$0xf]
        %v1892 = vld [vmem:[%s1886 + $0x14] sm:$0xf]
        %v1893 = vld [vmem:[%s1886 + $0x18] sm:$0xf]
        %v1894 = vld [vmem:[%s1886 + $0x1c] sm:$0xf]
        %v1895 = vld [vmem:[%s1886 + $0x20] sm:$0xf]
        %v1896 = vld [vmem:[%s1886 + $0x24] sm:$0xf]
        %v1897 = vld [vmem:[%s1886 + $0x28] sm:$0xf]
        %v1898 = vld [vmem:[%s1886 + $0x2c] sm:$0xf]
        %v1899 = vld [vmem:[%s1886 + $0x30] sm:$0xf]
        %v1900 = vld [vmem:[%s1886 + $0x34] sm:$0xf]
        %v1901 = vld [vmem:[%s1886 + $0x38] sm:$0xf]
        %v1902 = vld [vmem:[%s1886 + $0x3c] sm:$0xf]
        %v1903 = vld [vmem:[%s1886 + $0x40] sm:$0xf]
        %v1904 = vld [vmem:[%s1886 + $0x44] sm:$0xf]
        %v1905 = vld [vmem:[%s1886 + $0x48] sm:$0xf]
        %v1906 = vld [vmem:[%s1886 + $0x4c] sm:$0xf]
        %v1907 = vld [vmem:[%s1886 + $0x50] sm:$0xf]
        %v1908 = vld [vmem:[%s1886 + $0x54] sm:$0xf]
        %v1909 = vld [vmem:[%s1886 + $0x58] sm:$0xf]
        %v1910 = vld [vmem:[%s1886 + $0x5c] sm:$0xf]
        %v1911 = vld [vmem:[%s1886 + $0x60] sm:$0xf]
        %v1912 = vld [vmem:[%s1886 + $0x64] sm:$0xf]
        %v1913 = vld [vmem:[%s1886 + $0x68] sm:$0xf]
        %v1914 = vld [vmem:[%s1886 + $0x6c] sm:$0xf]
        %v1915 = vld [vmem:[%s1886 + $0x70] sm:$0xf]
        %v1916 = vld [vmem:[%s1886 + $0x74] sm:$0xf]
        %v1917 = vld [vmem:[%s1886 + $0x78] sm:$0xf]
        %v1918 = vld [vmem:[%s1886 + $0x7c] sm:$0xf]
        %v1919 = vld [vmem:[%s1886 + $0x80] sm:$0xf]
        %v1920 = vld [vmem:[%s1886 + $0x84] sm:$0xf]
        %v1921 = vld [vmem:[%s1886 + $0x88] sm:$0xf]
        %v1922 = vld [vmem:[%s1886 + $0x8c] sm:$0xf]
        %v1923 = vld [vmem:[%s1886 + $0x90] sm:$0xf]
        %v1924 = vld [vmem:[%s1886 + $0x94] sm:$0xf]
        %v1925 = vld [vmem:[%s1886 + $0x98] sm:$0xf]
        %v1926 = vld [vmem:[%s1886 + $0x9c] sm:$0xf]
        %v1927 = vld [vmem:[%s1886 + $0xa0] sm:$0xf]
        %v1928 = vld [vmem:[%s1886 + $0xa4] sm:$0xf]
        %v1929 = vld [vmem:[%s1886 + $0xa8] sm:$0xf]
        %v1930 = vld [vmem:[%s1886 + $0xac] sm:$0xf]
        %v1931 = vld [vmem:[%s1886 + $0xb0] sm:$0xf]
        %v1932 = vld [vmem:[%s1886 + $0xb4] sm:$0xf]
        %v1933 = vld [vmem:[%s1886 + $0xb8] sm:$0xf]
        %v1934 = vld [vmem:[%s1886 + $0xbc] sm:$0xf]
        %v1935 = vld [vmem:[%s1886 + $0xc0] sm:$0xf]
        %v1936 = vld [vmem:[%s1886 + $0xc4] sm:$0xf]
        %v1937 = vld [vmem:[%s1886 + $0xc8] sm:$0xf]
        %v1938 = vld [vmem:[%s1886 + $0xcc] sm:$0xf]
        %v1939 = vld [vmem:[%s1886 + $0xd0] sm:$0xf]
        %v1940 = vld [vmem:[%s1886 + $0xd4] sm:$0xf]
        %v1941 = vld [vmem:[%s1886 + $0xd8] sm:$0xf]
        %v1942 = vld [vmem:[%s1886 + $0xdc] sm:$0xf]
        %v1943 = vld [vmem:[%s1886 + $0xe0] sm:$0xf]
        %v1944 = vld [vmem:[%s1886 + $0xe4] sm:$0xf]
        %v1945 = vld [vmem:[%s1886 + $0xe8] sm:$0xf]
        %v1946 = vld [vmem:[%s1886 + $0xec] sm:$0xf]
        %v1947 = vld [vmem:[%s1886 + $0xf0] sm:$0xf]
        %v1948 = vld [vmem:[%s1886 + $0xf4] sm:$0xf]
        %v1949 = vld [vmem:[%s1886 + $0xf8] sm:$0xf]
        %v1950 = vld [vmem:[%s1886 + $0xfc] sm:$0xf]
        %v1951 = vld [vmem:[%s1886 + $0x100] sm:$0xf]
        %v1952 = vld [vmem:[%s1886 + $0x104] sm:$0xf]
        %v1953 = vld [vmem:[%s1886 + $0x108] sm:$0xf]
        %v1954 = vld [vmem:[%s1886 + $0x10c] sm:$0xf]
        %v1955 = vld [vmem:[%s1886 + $0x110] sm:$0xf]
        %v1956 = vld [vmem:[%s1886 + $0x114] sm:$0xf]
        %v1957 = vld [vmem:[%s1886 + $0x118] sm:$0xf]
        %v1958 = vld [vmem:[%s1886 + $0x11c] sm:$0xf]
        %v1959 = vld [vmem:[%s1886 + $0x120] sm:$0xf]
        %v1960 = vld [vmem:[%s1886 + $0x124] sm:$0xf]
        %v1961 = vld [vmem:[%s1886 + $0x128] sm:$0xf]
        %v1962 = vld [vmem:[%s1886 + $0x12c] sm:$0xf]
        %v1963 = vld [vmem:[%s1886 + $0x130] sm:$0xf]
        %v1964 = vld [vmem:[%s1886 + $0x134] sm:$0xf]
        %v1965 = vld [vmem:[%s1886 + $0x138] sm:$0xf]
        %v1966 = vld [vmem:[%s1886 + $0x13c] sm:$0xf]
        %s1967 = scalar_lea.vmem %s2, 4
        %v1968 = vld [vmem:[%s1967] sm:$0x1]
        %v1970 = vperm.slane %v1968, 0
        %v2052 = vunpack.c.l.b16 %v1887
        %v2053 = vunpack.c.l.b16 %v1888
        %v2054 = vunpack.c.l.b16 %v1889
        %v2055 = vunpack.c.l.b16 %v1890
        %v2056 = vunpack.c.l.b16 %v1891
        %v2057 = vunpack.c.l.b16 %v1892
        %v2058 = vunpack.c.l.b16 %v1893
        %v2059 = vunpack.c.l.b16 %v1894
        %v2060 = vunpack.c.l.b16 %v1895
        %v2061 = vunpack.c.l.b16 %v1896
        %v2062 = vunpack.c.l.b16 %v1897
        %v2063 = vunpack.c.l.b16 %v1898
        %v2064 = vunpack.c.l.b16 %v1899
        %v2065 = vunpack.c.l.b16 %v1900
        %v2066 = vunpack.c.l.b16 %v1901
        %v2067 = vunpack.c.l.b16 %v1902
        %v2068 = vunpack.c.l.b16 %v1903
        %v2069 = vunpack.c.l.b16 %v1904
        %v2070 = vunpack.c.l.b16 %v1905
        %v2071 = vunpack.c.l.b16 %v1906
        %v2072 = vunpack.c.l.b16 %v1907
        %v2073 = vunpack.c.l.b16 %v1908
        %v2074 = vunpack.c.l.b16 %v1909
        %v2075 = vunpack.c.l.b16 %v1910
        %v2076 = vunpack.c.l.b16 %v1911
        %v2077 = vunpack.c.l.b16 %v1912
        %v2078 = vunpack.c.l.b16 %v1913
        %v2079 = vunpack.c.l.b16 %v1914
        %v2080 = vunpack.c.l.b16 %v1915
        %v2081 = vunpack.c.l.b16 %v1916
        %v2082 = vunpack.c.l.b16 %v1917
        %v2083 = vunpack.c.l.b16 %v1918
        %v2084 = vunpack.c.l.b16 %v1919
        %v2085 = vunpack.c.l.b16 %v1920
        %v2086 = vunpack.c.l.b16 %v1921
        %v2087 = vunpack.c.l.b16 %v1922
        %v2088 = vunpack.c.l.b16 %v1923
        %v2089 = vunpack.c.l.b16 %v1924
        %v2090 = vunpack.c.l.b16 %v1925
        %v2091 = vunpack.c.l.b16 %v1926
        %v2092 = vunpack.c.l.b16 %v1927
        %v2093 = vunpack.c.l.b16 %v1928
        %v2094 = vunpack.c.l.b16 %v1929
        %v2095 = vunpack.c.l.b16 %v1930
        %v2096 = vunpack.c.l.b16 %v1931
        %v2097 = vunpack.c.l.b16 %v1932
        %v2098 = vunpack.c.l.b16 %v1933
        %v2099 = vunpack.c.l.b16 %v1934
        %v2100 = vunpack.c.l.b16 %v1935
        %v2101 = vunpack.c.l.b16 %v1936
        %v2102 = vunpack.c.l.b16 %v1937
        %v2103 = vunpack.c.l.b16 %v1938
        %v2104 = vunpack.c.l.b16 %v1939
        %v2105 = vunpack.c.l.b16 %v1940
        %v2106 = vunpack.c.l.b16 %v1941
        %v2107 = vunpack.c.l.b16 %v1942
        %v2108 = vunpack.c.l.b16 %v1943
        %v2109 = vunpack.c.l.b16 %v1944
        %v2110 = vunpack.c.l.b16 %v1945
        %v2111 = vunpack.c.l.b16 %v1946
        %v2112 = vunpack.c.l.b16 %v1947
        %v2113 = vunpack.c.l.b16 %v1948
        %v2114 = vunpack.c.l.b16 %v1949
        %v2115 = vunpack.c.l.b16 %v1950
        %v2116 = vunpack.c.l.b16 %v1951
        %v2117 = vunpack.c.l.b16 %v1952
        %v2118 = vunpack.c.l.b16 %v1953
        %v2119 = vunpack.c.l.b16 %v1954
        %v2120 = vunpack.c.l.b16 %v1955
        %v2121 = vunpack.c.l.b16 %v1956
        %v2122 = vunpack.c.l.b16 %v1957
        %v2123 = vunpack.c.l.b16 %v1958
        %v2124 = vunpack.c.l.b16 %v1959
        %v2125 = vunpack.c.l.b16 %v1960
        %v2126 = vunpack.c.l.b16 %v1961
        %v2127 = vunpack.c.l.b16 %v1962
        %v2128 = vunpack.c.l.b16 %v1963
        %v2129 = vunpack.c.l.b16 %v1964
        %v2130 = vunpack.c.l.b16 %v1965
        %v2131 = vunpack.c.l.b16 %v1966
        %v2132 = vpack.c.b16 %v2053, %v2052
        %v2133 = vpack.c.b16 %v2055, %v2054
        %v2134 = vpack.c.b16 %v2057, %v2056
        %v2135 = vpack.c.b16 %v2059, %v2058
        %v2136 = vpack.c.b16 %v2061, %v2060
        %v2137 = vpack.c.b16 %v2063, %v2062
        %v2138 = vpack.c.b16 %v2065, %v2064
        %v2139 = vpack.c.b16 %v2067, %v2066
        %v2140 = vpack.c.b16 %v2069, %v2068
        %v2141 = vpack.c.b16 %v2071, %v2070
        %v2142 = vpack.c.b16 %v2073, %v2072
        %v2143 = vpack.c.b16 %v2075, %v2074
        %v2144 = vpack.c.b16 %v2077, %v2076
        %v2145 = vpack.c.b16 %v2079, %v2078
        %v2146 = vpack.c.b16 %v2081, %v2080
        %v2147 = vpack.c.b16 %v2083, %v2082
        %v2148 = vpack.c.b16 %v2085, %v2084
        %v2149 = vpack.c.b16 %v2087, %v2086
        %v2150 = vpack.c.b16 %v2089, %v2088
        %v2151 = vpack.c.b16 %v2091, %v2090
        %v2152 = vpack.c.b16 %v2093, %v2092
        %v2153 = vpack.c.b16 %v2095, %v2094
        %v2154 = vpack.c.b16 %v2097, %v2096
        %v2155 = vpack.c.b16 %v2099, %v2098
        %v2156 = vpack.c.b16 %v2101, %v2100
        %v2157 = vpack.c.b16 %v2103, %v2102
        %v2158 = vpack.c.b16 %v2105, %v2104
        %v2159 = vpack.c.b16 %v2107, %v2106
        %v2160 = vpack.c.b16 %v2109, %v2108
        %v2161 = vpack.c.b16 %v2111, %v2110
        %v2162 = vpack.c.b16 %v2113, %v2112
        %v2163 = vpack.c.b16 %v2115, %v2114
        %v2164 = vpack.c.b16 %v2117, %v2116
        %v2165 = vpack.c.b16 %v2119, %v2118
        %v2166 = vpack.c.b16 %v2121, %v2120
        %v2167 = vpack.c.b16 %v2123, %v2122
        %v2168 = vpack.c.b16 %v2125, %v2124
        %v2169 = vpack.c.b16 %v2127, %v2126
        %v2170 = vpack.c.b16 %v2129, %v2128
        %v2171 = vpack.c.b16 %v2131, %v2130
        %2212 = vmatpush.bf16.msra.mxu0 %v2139
        %2213 = vmatpush.bf16.msra.mxu0 %v2138
        %2214 = vmatpush.bf16.msra.mxu0 %v2137
        %2215 = vmatpush.bf16.msra.mxu0 %v2136
        %2216 = vmatpush.bf16.msra.mxu0 %v2135
        %2217 = vmatpush.bf16.msra.mxu0 %v2134
        %2218 = vmatpush.bf16.msra.mxu0 %v2133
        %2219 = vmatpush.bf16.msra.mxu0 %v2132
        %2220 = vmatmul.bf16.gmra.mxu0 %v1881
        %v2221 = vpop.f32.mrf.mxu0
        %v2222 = vadd.f32 %v1970, %v2221
        %v2223 = vpop.f32.mrf.mxu0
        %2224 = vdwg.mxu0
        %2225 = vmatpush.bf16.msra.mxu0 %v2147
        %2226 = vmatpush.bf16.msra.mxu0 %v2146
        %2227 = vmatpush.bf16.msra.mxu0 %v2145
        %2228 = vmatpush.bf16.msra.mxu0 %v2144
        %2229 = vmatpush.bf16.msra.mxu0 %v2143
        %2230 = vmatpush.bf16.msra.mxu0 %v2142
        %2231 = vmatpush.bf16.msra.mxu0 %v2141
        %2232 = vmatpush.bf16.msra.mxu0 %v2140
        %2233 = vmatmul.bf16.gmra.mxu0 %v1882
        %v2234 = vpop.f32.mrf.mxu0
        %v2235 = vadd.f32 %v2222, %v2234
        %v2236 = vpop.f32.mrf.mxu0
        %2237 = vdwg.mxu0
        %2238 = vmatpush.bf16.msra.mxu0 %v2155
        %2239 = vmatpush.bf16.msra.mxu0 %v2154
        %2240 = vmatpush.bf16.msra.mxu0 %v2153
        %2241 = vmatpush.bf16.msra.mxu0 %v2152
        %2242 = vmatpush.bf16.msra.mxu0 %v2151
        %2243 = vmatpush.bf16.msra.mxu0 %v2150
        %2244 = vmatpush.bf16.msra.mxu0 %v2149
        %2245 = vmatpush.bf16.msra.mxu0 %v2148
        %2246 = vmatmul.bf16.gmra.mxu0 %v1883
        %v2247 = vpop.f32.mrf.mxu0
        %v2248 = vadd.f32 %v2235, %v2247
        %v2249 = vpop.f32.mrf.mxu0
        %2250 = vdwg.mxu0
        %2251 = vmatpush.bf16.msra.mxu0 %v2163
        %2252 = vmatpush.bf16.msra.mxu0 %v2162
        %2253 = vmatpush.bf16.msra.mxu0 %v2161
        %2254 = vmatpush.bf16.msra.mxu0 %v2160
        %2255 = vmatpush.bf16.msra.mxu0 %v2159
        %2256 = vmatpush.bf16.msra.mxu0 %v2158
        %2257 = vmatpush.bf16.msra.mxu0 %v2157
        %2258 = vmatpush.bf16.msra.mxu0 %v2156
        %2259 = vmatmul.bf16.gmra.mxu0 %v1884
        %v2260 = vpop.f32.mrf.mxu0
        %v2261 = vadd.f32 %v2248, %v2260
        %v2262 = vpop.f32.mrf.mxu0
        %2263 = vdwg.mxu0
        %2264 = vmatpush.bf16.msra.mxu0 %v2171
        %2265 = vmatpush.bf16.msra.mxu0 %v2170
        %2266 = vmatpush.bf16.msra.mxu0 %v2169
        %2267 = vmatpush.bf16.msra.mxu0 %v2168
        %2268 = vmatpush.bf16.msra.mxu0 %v2167
        %2269 = vmatpush.bf16.msra.mxu0 %v2166
        %2270 = vmatpush.bf16.msra.mxu0 %v2165
        %2271 = vmatpush.bf16.msra.mxu0 %v2164
        %2272 = vmatmul.bf16.gmra.mxu0 %v1885
        %v2273 = vpop.f32.mrf.mxu0
        %v2274 = vadd.f32 %v2261, %v2273
        %v2275 = vpop.f32.mrf.mxu0
        %2276 = vdwg.mxu0
        %v2277 = vtanh.pop %v2274
        %2278 = vst [vmem:[#allocation2 + $0x2] sm:$0xff] %v2277
        %v2279 = vld [vmem:[#allocation2] sm:$0xff]
        %v2280 = vld [vmem:[#allocation2 + $0x8] sm:$0xf]
        %v2283 = vrot.slane %v2279, 1
        %v2284 = vrot.slane %v2280, 1
        %v2285 = vsel %vm191, %v2283, %v2284
        %v2287 = vrot.slane %v2279, 2
        %v2288 = vrot.slane %v2280, 2
        %v2289 = vsel %vm196, %v2287, %v2288
        %v2291 = vrot.slane %v2279, 3
        %v2292 = vrot.slane %v2280, 3
        %v2293 = vsel %vm201, %v2291, %v2292
        %v2295 = vrot.slane %v2279, 4
        %v2296 = vrot.slane %v2280, 4
        %v2297 = vsel %vm206, %v2295, %v2296
        %v2299 = vpack.c.bf16 %v2279, %v2279
        %v2300 = vpack.c.bf16 %v2285, %v2285
        %v2301 = vpack.c.bf16 %v2289, %v2289
        %v2302 = vpack.c.bf16 %v2293, %v2293
        %v2303 = vpack.c.bf16 %v2297, %v2297
        %s2304 = scalar_lea.vmem [#allocation3], 1600
        %v2305 = vld [vmem:[%s2304] sm:$0xf]
        %v2306 = vld [vmem:[%s2304 + $0x4] sm:$0xf]
        %v2307 = vld [vmem:[%s2304 + $0x8] sm:$0xf]
        %v2308 = vld [vmem:[%s2304 + $0xc] sm:$0xf]
        %v2309 = vld [vmem:[%s2304 + $0x10] sm:$0xf]
        %v2310 = vld [vmem:[%s2304 + $0x14] sm:$0xf]
        %v2311 = vld [vmem:[%s2304 + $0x18] sm:$0xf]
        %v2312 = vld [vmem:[%s2304 + $0x1c] sm:$0xf]
        %v2313 = vld [vmem:[%s2304 + $0x20] sm:$0xf]
        %v2314 = vld [vmem:[%s2304 + $0x24] sm:$0xf]
        %v2315 = vld [vmem:[%s2304 + $0x28] sm:$0xf]
        %v2316 = vld [vmem:[%s2304 + $0x2c] sm:$0xf]
        %v2317 = vld [vmem:[%s2304 + $0x30] sm:$0xf]
        %v2318 = vld [vmem:[%s2304 + $0x34] sm:$0xf]
        %v2319 = vld [vmem:[%s2304 + $0x38] sm:$0xf]
        %v2320 = vld [vmem:[%s2304 + $0x3c] sm:$0xf]
        %v2321 = vld [vmem:[%s2304 + $0x40] sm:$0xf]
        %v2322 = vld [vmem:[%s2304 + $0x44] sm:$0xf]
        %v2323 = vld [vmem:[%s2304 + $0x48] sm:$0xf]
        %v2324 = vld [vmem:[%s2304 + $0x4c] sm:$0xf]
        %v2325 = vld [vmem:[%s2304 + $0x50] sm:$0xf]
        %v2326 = vld [vmem:[%s2304 + $0x54] sm:$0xf]
        %v2327 = vld [vmem:[%s2304 + $0x58] sm:$0xf]
        %v2328 = vld [vmem:[%s2304 + $0x5c] sm:$0xf]
        %v2329 = vld [vmem:[%s2304 + $0x60] sm:$0xf]
        %v2330 = vld [vmem:[%s2304 + $0x64] sm:$0xf]
        %v2331 = vld [vmem:[%s2304 + $0x68] sm:$0xf]
        %v2332 = vld [vmem:[%s2304 + $0x6c] sm:$0xf]
        %v2333 = vld [vmem:[%s2304 + $0x70] sm:$0xf]
        %v2334 = vld [vmem:[%s2304 + $0x74] sm:$0xf]
        %v2335 = vld [vmem:[%s2304 + $0x78] sm:$0xf]
        %v2336 = vld [vmem:[%s2304 + $0x7c] sm:$0xf]
        %v2337 = vld [vmem:[%s2304 + $0x80] sm:$0xf]
        %v2338 = vld [vmem:[%s2304 + $0x84] sm:$0xf]
        %v2339 = vld [vmem:[%s2304 + $0x88] sm:$0xf]
        %v2340 = vld [vmem:[%s2304 + $0x8c] sm:$0xf]
        %v2341 = vld [vmem:[%s2304 + $0x90] sm:$0xf]
        %v2342 = vld [vmem:[%s2304 + $0x94] sm:$0xf]
        %v2343 = vld [vmem:[%s2304 + $0x98] sm:$0xf]
        %v2344 = vld [vmem:[%s2304 + $0x9c] sm:$0xf]
        %v2345 = vld [vmem:[%s2304 + $0xa0] sm:$0xf]
        %v2346 = vld [vmem:[%s2304 + $0xa4] sm:$0xf]
        %v2347 = vld [vmem:[%s2304 + $0xa8] sm:$0xf]
        %v2348 = vld [vmem:[%s2304 + $0xac] sm:$0xf]
        %v2349 = vld [vmem:[%s2304 + $0xb0] sm:$0xf]
        %v2350 = vld [vmem:[%s2304 + $0xb4] sm:$0xf]
        %v2351 = vld [vmem:[%s2304 + $0xb8] sm:$0xf]
        %v2352 = vld [vmem:[%s2304 + $0xbc] sm:$0xf]
        %v2353 = vld [vmem:[%s2304 + $0xc0] sm:$0xf]
        %v2354 = vld [vmem:[%s2304 + $0xc4] sm:$0xf]
        %v2355 = vld [vmem:[%s2304 + $0xc8] sm:$0xf]
        %v2356 = vld [vmem:[%s2304 + $0xcc] sm:$0xf]
        %v2357 = vld [vmem:[%s2304 + $0xd0] sm:$0xf]
        %v2358 = vld [vmem:[%s2304 + $0xd4] sm:$0xf]
        %v2359 = vld [vmem:[%s2304 + $0xd8] sm:$0xf]
        %v2360 = vld [vmem:[%s2304 + $0xdc] sm:$0xf]
        %v2361 = vld [vmem:[%s2304 + $0xe0] sm:$0xf]
        %v2362 = vld [vmem:[%s2304 + $0xe4] sm:$0xf]
        %v2363 = vld [vmem:[%s2304 + $0xe8] sm:$0xf]
        %v2364 = vld [vmem:[%s2304 + $0xec] sm:$0xf]
        %v2365 = vld [vmem:[%s2304 + $0xf0] sm:$0xf]
        %v2366 = vld [vmem:[%s2304 + $0xf4] sm:$0xf]
        %v2367 = vld [vmem:[%s2304 + $0xf8] sm:$0xf]
        %v2368 = vld [vmem:[%s2304 + $0xfc] sm:$0xf]
        %v2369 = vld [vmem:[%s2304 + $0x100] sm:$0xf]
        %v2370 = vld [vmem:[%s2304 + $0x104] sm:$0xf]
        %v2371 = vld [vmem:[%s2304 + $0x108] sm:$0xf]
        %v2372 = vld [vmem:[%s2304 + $0x10c] sm:$0xf]
        %v2373 = vld [vmem:[%s2304 + $0x110] sm:$0xf]
        %v2374 = vld [vmem:[%s2304 + $0x114] sm:$0xf]
        %v2375 = vld [vmem:[%s2304 + $0x118] sm:$0xf]
        %v2376 = vld [vmem:[%s2304 + $0x11c] sm:$0xf]
        %v2377 = vld [vmem:[%s2304 + $0x120] sm:$0xf]
        %v2378 = vld [vmem:[%s2304 + $0x124] sm:$0xf]
        %v2379 = vld [vmem:[%s2304 + $0x128] sm:$0xf]
        %v2380 = vld [vmem:[%s2304 + $0x12c] sm:$0xf]
        %v2381 = vld [vmem:[%s2304 + $0x130] sm:$0xf]
        %v2382 = vld [vmem:[%s2304 + $0x134] sm:$0xf]
        %v2383 = vld [vmem:[%s2304 + $0x138] sm:$0xf]
        %v2384 = vld [vmem:[%s2304 + $0x13c] sm:$0xf]
        %s2385 = scalar_lea.vmem %s2, 5
        %v2386 = vld [vmem:[%s2385] sm:$0x1]
        %v2388 = vperm.slane %v2386, 0
        %v2470 = vunpack.c.l.b16 %v2305
        %v2471 = vunpack.c.l.b16 %v2306
        %v2472 = vunpack.c.l.b16 %v2307
        %v2473 = vunpack.c.l.b16 %v2308
        %v2474 = vunpack.c.l.b16 %v2309
        %v2475 = vunpack.c.l.b16 %v2310
        %v2476 = vunpack.c.l.b16 %v2311
        %v2477 = vunpack.c.l.b16 %v2312
        %v2478 = vunpack.c.l.b16 %v2313
        %v2479 = vunpack.c.l.b16 %v2314
        %v2480 = vunpack.c.l.b16 %v2315
        %v2481 = vunpack.c.l.b16 %v2316
        %v2482 = vunpack.c.l.b16 %v2317
        %v2483 = vunpack.c.l.b16 %v2318
        %v2484 = vunpack.c.l.b16 %v2319
        %v2485 = vunpack.c.l.b16 %v2320
        %v2486 = vunpack.c.l.b16 %v2321
        %v2487 = vunpack.c.l.b16 %v2322
        %v2488 = vunpack.c.l.b16 %v2323
        %v2489 = vunpack.c.l.b16 %v2324
        %v2490 = vunpack.c.l.b16 %v2325
        %v2491 = vunpack.c.l.b16 %v2326
        %v2492 = vunpack.c.l.b16 %v2327
        %v2493 = vunpack.c.l.b16 %v2328
        %v2494 = vunpack.c.l.b16 %v2329
        %v2495 = vunpack.c.l.b16 %v2330
        %v2496 = vunpack.c.l.b16 %v2331
        %v2497 = vunpack.c.l.b16 %v2332
        %v2498 = vunpack.c.l.b16 %v2333
        %v2499 = vunpack.c.l.b16 %v2334
        %v2500 = vunpack.c.l.b16 %v2335
        %v2501 = vunpack.c.l.b16 %v2336
        %v2502 = vunpack.c.l.b16 %v2337
        %v2503 = vunpack.c.l.b16 %v2338
        %v2504 = vunpack.c.l.b16 %v2339
        %v2505 = vunpack.c.l.b16 %v2340
        %v2506 = vunpack.c.l.b16 %v2341
        %v2507 = vunpack.c.l.b16 %v2342
        %v2508 = vunpack.c.l.b16 %v2343
        %v2509 = vunpack.c.l.b16 %v2344
        %v2510 = vunpack.c.l.b16 %v2345
        %v2511 = vunpack.c.l.b16 %v2346
        %v2512 = vunpack.c.l.b16 %v2347
        %v2513 = vunpack.c.l.b16 %v2348
        %v2514 = vunpack.c.l.b16 %v2349
        %v2515 = vunpack.c.l.b16 %v2350
        %v2516 = vunpack.c.l.b16 %v2351
        %v2517 = vunpack.c.l.b16 %v2352
        %v2518 = vunpack.c.l.b16 %v2353
        %v2519 = vunpack.c.l.b16 %v2354
        %v2520 = vunpack.c.l.b16 %v2355
        %v2521 = vunpack.c.l.b16 %v2356
        %v2522 = vunpack.c.l.b16 %v2357
        %v2523 = vunpack.c.l.b16 %v2358
        %v2524 = vunpack.c.l.b16 %v2359
        %v2525 = vunpack.c.l.b16 %v2360
        %v2526 = vunpack.c.l.b16 %v2361
        %v2527 = vunpack.c.l.b16 %v2362
        %v2528 = vunpack.c.l.b16 %v2363
        %v2529 = vunpack.c.l.b16 %v2364
        %v2530 = vunpack.c.l.b16 %v2365
        %v2531 = vunpack.c.l.b16 %v2366
        %v2532 = vunpack.c.l.b16 %v2367
        %v2533 = vunpack.c.l.b16 %v2368
        %v2534 = vunpack.c.l.b16 %v2369
        %v2535 = vunpack.c.l.b16 %v2370
        %v2536 = vunpack.c.l.b16 %v2371
        %v2537 = vunpack.c.l.b16 %v2372
        %v2538 = vunpack.c.l.b16 %v2373
        %v2539 = vunpack.c.l.b16 %v2374
        %v2540 = vunpack.c.l.b16 %v2375
        %v2541 = vunpack.c.l.b16 %v2376
        %v2542 = vunpack.c.l.b16 %v2377
        %v2543 = vunpack.c.l.b16 %v2378
        %v2544 = vunpack.c.l.b16 %v2379
        %v2545 = vunpack.c.l.b16 %v2380
        %v2546 = vunpack.c.l.b16 %v2381
        %v2547 = vunpack.c.l.b16 %v2382
        %v2548 = vunpack.c.l.b16 %v2383
        %v2549 = vunpack.c.l.b16 %v2384
        %v2550 = vpack.c.b16 %v2471, %v2470
        %v2551 = vpack.c.b16 %v2473, %v2472
        %v2552 = vpack.c.b16 %v2475, %v2474
        %v2553 = vpack.c.b16 %v2477, %v2476
        %v2554 = vpack.c.b16 %v2479, %v2478
        %v2555 = vpack.c.b16 %v2481, %v2480
        %v2556 = vpack.c.b16 %v2483, %v2482
        %v2557 = vpack.c.b16 %v2485, %v2484
        %v2558 = vpack.c.b16 %v2487, %v2486
        %v2559 = vpack.c.b16 %v2489, %v2488
        %v2560 = vpack.c.b16 %v2491, %v2490
        %v2561 = vpack.c.b16 %v2493, %v2492
        %v2562 = vpack.c.b16 %v2495, %v2494
        %v2563 = vpack.c.b16 %v2497, %v2496
        %v2564 = vpack.c.b16 %v2499, %v2498
        %v2565 = vpack.c.b16 %v2501, %v2500
        %v2566 = vpack.c.b16 %v2503, %v2502
        %v2567 = vpack.c.b16 %v2505, %v2504
        %v2568 = vpack.c.b16 %v2507, %v2506
        %v2569 = vpack.c.b16 %v2509, %v2508
        %v2570 = vpack.c.b16 %v2511, %v2510
        %v2571 = vpack.c.b16 %v2513, %v2512
        %v2572 = vpack.c.b16 %v2515, %v2514
        %v2573 = vpack.c.b16 %v2517, %v2516
        %v2574 = vpack.c.b16 %v2519, %v2518
        %v2575 = vpack.c.b16 %v2521, %v2520
        %v2576 = vpack.c.b16 %v2523, %v2522
        %v2577 = vpack.c.b16 %v2525, %v2524
        %v2578 = vpack.c.b16 %v2527, %v2526
        %v2579 = vpack.c.b16 %v2529, %v2528
        %v2580 = vpack.c.b16 %v2531, %v2530
        %v2581 = vpack.c.b16 %v2533, %v2532
        %v2582 = vpack.c.b16 %v2535, %v2534
        %v2583 = vpack.c.b16 %v2537, %v2536
        %v2584 = vpack.c.b16 %v2539, %v2538
        %v2585 = vpack.c.b16 %v2541, %v2540
        %v2586 = vpack.c.b16 %v2543, %v2542
        %v2587 = vpack.c.b16 %v2545, %v2544
        %v2588 = vpack.c.b16 %v2547, %v2546
        %v2589 = vpack.c.b16 %v2549, %v2548
        %2630 = vmatpush.bf16.msra.mxu0 %v2557
        %2631 = vmatpush.bf16.msra.mxu0 %v2556
        %2632 = vmatpush.bf16.msra.mxu0 %v2555
        %2633 = vmatpush.bf16.msra.mxu0 %v2554
        %2634 = vmatpush.bf16.msra.mxu0 %v2553
        %2635 = vmatpush.bf16.msra.mxu0 %v2552
        %2636 = vmatpush.bf16.msra.mxu0 %v2551
        %2637 = vmatpush.bf16.msra.mxu0 %v2550
        %2638 = vmatmul.bf16.gmra.mxu0 %v2299
        %v2639 = vpop.f32.mrf.mxu0
        %v2640 = vadd.f32 %v2388, %v2639
        %v2641 = vpop.f32.mrf.mxu0
        %2642 = vdwg.mxu0
        %2643 = vmatpush.bf16.msra.mxu0 %v2565
        %2644 = vmatpush.bf16.msra.mxu0 %v2564
        %2645 = vmatpush.bf16.msra.mxu0 %v2563
        %2646 = vmatpush.bf16.msra.mxu0 %v2562
        %2647 = vmatpush.bf16.msra.mxu0 %v2561
        %2648 = vmatpush.bf16.msra.mxu0 %v2560
        %2649 = vmatpush.bf16.msra.mxu0 %v2559
        %2650 = vmatpush.bf16.msra.mxu0 %v2558
        %2651 = vmatmul.bf16.gmra.mxu0 %v2300
        %v2652 = vpop.f32.mrf.mxu0
        %v2653 = vadd.f32 %v2640, %v2652
        %v2654 = vpop.f32.mrf.mxu0
        %2655 = vdwg.mxu0
        %2656 = vmatpush.bf16.msra.mxu0 %v2573
        %2657 = vmatpush.bf16.msra.mxu0 %v2572
        %2658 = vmatpush.bf16.msra.mxu0 %v2571
        %2659 = vmatpush.bf16.msra.mxu0 %v2570
        %2660 = vmatpush.bf16.msra.mxu0 %v2569
        %2661 = vmatpush.bf16.msra.mxu0 %v2568
        %2662 = vmatpush.bf16.msra.mxu0 %v2567
        %2663 = vmatpush.bf16.msra.mxu0 %v2566
        %2664 = vmatmul.bf16.gmra.mxu0 %v2301
        %v2665 = vpop.f32.mrf.mxu0
        %v2666 = vadd.f32 %v2653, %v2665
        %v2667 = vpop.f32.mrf.mxu0
        %2668 = vdwg.mxu0
        %2669 = vmatpush.bf16.msra.mxu0 %v2581
        %2670 = vmatpush.bf16.msra.mxu0 %v2580
        %2671 = vmatpush.bf16.msra.mxu0 %v2579
        %2672 = vmatpush.bf16.msra.mxu0 %v2578
        %2673 = vmatpush.bf16.msra.mxu0 %v2577
        %2674 = vmatpush.bf16.msra.mxu0 %v2576
        %2675 = vmatpush.bf16.msra.mxu0 %v2575
        %2676 = vmatpush.bf16.msra.mxu0 %v2574
        %2677 = vmatmul.bf16.gmra.mxu0 %v2302
        %v2678 = vpop.f32.mrf.mxu0
        %v2679 = vadd.f32 %v2666, %v2678
        %v2680 = vpop.f32.mrf.mxu0
        %2681 = vdwg.mxu0
        %2682 = vmatpush.bf16.msra.mxu0 %v2589
        %2683 = vmatpush.bf16.msra.mxu0 %v2588
        %2684 = vmatpush.bf16.msra.mxu0 %v2587
        %2685 = vmatpush.bf16.msra.mxu0 %v2586
        %2686 = vmatpush.bf16.msra.mxu0 %v2585
        %2687 = vmatpush.bf16.msra.mxu0 %v2584
        %2688 = vmatpush.bf16.msra.mxu0 %v2583
        %2689 = vmatpush.bf16.msra.mxu0 %v2582
        %2690 = vmatmul.bf16.gmra.mxu0 %v2303
        %v2691 = vpop.f32.mrf.mxu0
        %v2692 = vadd.f32 %v2679, %v2691
        %v2693 = vpop.f32.mrf.mxu0
        %2694 = vdwg.mxu0
        %2695 = vst [vmem:[%s178] sm:$0xff] %v2692
        %s2696 = sand.u32 %s94, 1
        %s2697 = scalar_lea.sflag [#allocation5], %s2696
        %s2698 = sand.u32 %s94, 1
        %s2699 = smul.addr %s2698, 8
        %s2700 = scalar_lea.vmem [#allocation6], %s2699
        // Predicated region
        $region37: #{postnet_forward.1} parent=31 // pred_check
          %p2701 = pneg %p104
        $region38: #{postnet_forward.1} parent=31 // pred_check_branch
          %2703 = sbr.rel (%p2701) target = $region40
        $region39: #{postnet_forward.1} parent=31 // pred_region
          %2705 = vsyncadd %s2697, 0
          %s2706 = smul.addr %s18, 8
          %s2707 = scalar_lea.hbm %s3, %s2706
          %s2709 = sshll.u32 %s2700, 4
          %s2710 = int_to_ptr.vmem [resolvable:$true] %s2709
          %s2711 = sshll.u32 %s2707, 4
          %s2712 = int_to_ptr.hbm [resolvable:$true] %s2711
          %2714 = dma.vmem_to_hbm [thread:$0]  %s2710, 128, %s2712, %s2697
        $region40: #{postnet_forward.1} parent=31 // pred_fallthru
          _
      $region32: #{postnet_forward.1} parent=5 // pred_fallthru
        _
      %p2715 = scmp.le.s32.totalorder 2, %s13
      // Predicated region
      $region41: #{postnet_forward.1} parent=5 // pred_check
        %p2716 = pneg %p2715
      $region42: #{postnet_forward.1} parent=5 // pred_check_branch
        %2718 = sbr.rel (%p2716) target = $region44
      $region43: #{postnet_forward.1} parent=5 // pred_region
        %s2719 = ssub.s32 %s13, 2
        // Predicated region
        $region45: #{postnet_forward.1} parent=43 // pred_check
          %p2720 = pneg %p110
        $region46: #{postnet_forward.1} parent=43 // pred_check_branch
          %2722 = sbr.rel (%p2720) target = $region48
        $region47: #{postnet_forward.1} parent=43 // pred_region
          %s2723 = sand.u32 %s95, 1
          %s2724 = scalar_lea.sflag [#allocation5], %s2723
          %s2725 = sand.u32 %s95, 1
          %s2726 = smul.addr %s2725, 8
          %s2727 = scalar_lea.vmem [#allocation6], %s2726
          %2729 = dma.done %s2724, 128
        $region48: #{postnet_forward.1} parent=43 // pred_fallthru
          _
      $region44: #{postnet_forward.1} parent=5 // pred_fallthru
        _
    $region6: #{postnet_forward.1} parent=1 // loop_footer
      %s17 = sadd.s32 1, %s13
    $region7: #{postnet_forward.1} parent=1 // loop_footer_branch
      %12 = sbr.rel target = $region3
    $region8: #{postnet_forward.1} parent=1 // loop_exit
      _
    %2730 = vsyncpa [#allocation4], 1
    %s2731 = scalar_lea.sflag [#allocation4], 1
    %2732 = vsyncpa %s2731, 1
    %2733 = vsyncpa [#allocation5], 1
    %s2734 = scalar_lea.sflag [#allocation5], 1
    %2735 = vsyncpa %s2734, 1

</llo_original>
